<compile_context>
chip_gen: v7x
topology: tpu7x:2x2x1
jax: 0.10.0
libtpu: 0.0.40
codegen_flags: <defaults>
</compile_context>

<pallas_src>
import numpy as np
import jax
import jax.numpy as jnp
from jax import lax
from jax.experimental import pallas as pl
from jax.experimental.pallas import tpu as pltpu

# ---- problem sizes (consistent with the module's __init__) ------------------
B = 2              # batch
F = 4              # n_features      (conv1 in_channels)
T = 16             # window_size     (conv "time"/H dim)
A = 8              # n_assets        (conv "asset"/W dim)
K = 5              # cnn_kernel_time_size (odd -> torch 'same' pad is symmetric)
PAD = (K - 1) // 2
C1 = 32            # conv1 out channels
C2 = 64            # conv2 out channels
CNN_OUT = C2 * T   # Flatten of (B, 64, T, 1) -> 1024
H1 = 256
H2 = 128
BT = B * T         # 32 conv rows, t-major (row = t*B + b)
AKF = A * K * F    # 160 im2col feature width
AC1 = A * C1       # 256 conv1 output width (block-diagonal -> one 256-wide pass)
LANES = 256        # lane width of every packed weight block
OUT_W = 256        # lane-padded scalar output width (value in column 0)

# row offsets inside the single stacked (1968, 256) bf16 weight buffer
# (every block starts at a multiple of 16 rows = one bf16 sublane tile)
W1_LO, W1_HI = 0, AKF                          # conv1 block-diagonal   (160 rows)
W2_LO, W2_HI = W1_HI, W1_HI + AC1              # conv2, lane-padded     (256 rows)
WC_LO, WC_HI = W2_HI, W2_HI + T * C2           # mlp[0] cnn part        (1024 rows)
WW_LO = WC_HI                                  # mlp[0] cw part         (8 rows, padded to 16)
WM2_LO, WM2_HI = WW_LO + 16, WW_LO + 16 + H1   # mlp[2], lane-padded    (256 rows)
WM3_LO, WM3_HI = WM2_HI, WM2_HI + LANES        # mlp[4], lane-padded    (256 rows)
WBIG_ROWS = WM3_HI                             # 1968

# lane offsets inside the packed (1, 1280) f32 bias buffer (all 128-aligned)
B1_LO, B1_HI = 0, AC1                          # conv1 bias, tiled A times
B2_LO, B2_HI = 256, 512                        # conv2 bias (64 real + zeros)
BM1_LO, BM1_HI = 512, 768                      # mlp[0] bias
BM2_LO, BM2_HI = 768, 1024                     # mlp[2] bias (128 real + zeros)
BM3_LO, BM3_HI = 1024, 1280                    # mlp[4] bias (scalar at lane 0)
BIAS_W = 1280


# ---------------------------- Pallas kernel ----------------------------------
def critic_kernel(act_ref, wbig_ref, bias_ref, out_ref):
    act = act_ref[...]                                   # (BT+B, AKF) bf16
    xcol = act[0:BT, :]                                  # (32, 160) im2col rows
    cw = act[BT:BT + B, 0:A]                             # (2, 8) current_weights

    # conv1 (kernel (K,1), 'same' time pad) + ReLU as ONE im2col matmul against
    # the block-diagonal (A*K*F, A*C1) weight.
    h1 = jnp.dot(xcol, wbig_ref[W1_LO:W1_HI, :],
                 preferred_element_type=jnp.float32)
    h1 = jnp.maximum(h1 + bias_ref[:, B1_LO:B1_HI], 0.0)            # (32, 256) f32

    # conv2 (kernel (1, A)) + ReLU: contraction over (asset, in_channel).
    # Weight is lane-padded to 256 (cols C2: are zero), so no masked-width dot.
    h2 = jnp.dot(h1.astype(jnp.bfloat16), wbig_ref[W2_LO:W2_HI, :],
                 preferred_element_type=jnp.float32)
    h2 = jnp.maximum(h2 + bias_ref[:, B2_LO:B2_HI], 0.0)            # (32, 256) f32

    # mlp[0]: Flatten + concat(current_weights) + Linear + ReLU.
    # One-shot (T*B, C2) -> (B, T*C2) flatten (only ~2 bf16 vregs of data) as a
    # lane concatenation of the T two-row time slices, then a SINGLE
    # (B, 1024)@(1024, 256) MXU dot plus one tiny dot for current_weights.
    h2c = h2[:, :C2].astype(jnp.bfloat16)                            # (32, 64)
    flat = jnp.concatenate([h2c[t * B:(t + 1) * B, :] for t in range(T)],
                           axis=1)                                   # (2, 1024)
    z = jnp.dot(flat, wbig_ref[WC_LO:WC_HI, :],
                preferred_element_type=jnp.float32)
    z = z + jnp.dot(cw, wbig_ref[WW_LO:WW_LO + A, :],
                    preferred_element_type=jnp.float32)
    z = jnp.maximum(z + bias_ref[:, BM1_LO:BM1_HI], 0.0)             # (2, 256)

    # mlp[2] + ReLU (lane-padded weight/bias: cols 128: stay exactly zero).
    z = jnp.dot(z.astype(jnp.bfloat16), wbig_ref[WM2_LO:WM2_HI, :],
                preferred_element_type=jnp.float32)
    z = jnp.maximum(z + bias_ref[:, BM2_LO:BM2_HI], 0.0)             # (2, 256)

    # mlp[4]: lane-padded (B, 256) result, real value in column 0.
    v = jnp.dot(z.astype(jnp.bfloat16), wbig_ref[WM3_LO:WM3_HI, :],
                preferred_element_type=jnp.float32)
    out_ref[...] = v + bias_ref[:, BM3_LO:BM3_HI]                    # (2, 256)


# ---------------------- one-time parameter packing ----------------------------
def pack_params(params):
    """PyTorch-layout params -> (wbig bf16, biases f32). Call ONCE per weight set."""
    w1t, b1, w2t, b2, wm1, bm1, wm2, bm2, wm3, bm3 = params

    # conv1 (C1,F,K,1) -> per-asset block (K*F,C1) -> block-diagonal (A*K*F, A*C1)
    w1_blk = jnp.transpose(w1t[..., 0], (2, 1, 0)).reshape(K * F, C1)
    w1_big = jnp.kron(jnp.eye(A, dtype=jnp.float32), w1_blk)              # (160, 256)
    # conv2 (C2,C1,1,A) -> (A*C1, C2) with row index a*C1 + c1, lane-padded to 256
    w2k = jnp.transpose(w2t[:, :, 0, :], (2, 1, 0)).reshape(AC1, C2)
    w2_pad = jnp.zeros((AC1, LANES), jnp.float32).at[:, :C2].set(w2k)
    # mlp[0] cnn part: PyTorch Flatten is c-major (col = c2*T + t); the kernel's
    # flattened rows are (t, c2)-major -> remap to (T*C2, H1) rows t*C2 + c2.
    wm1c = jnp.transpose(wm1[:, :CNN_OUT].reshape(H1, C2, T),
                         (2, 1, 0)).reshape(T * C2, H1)
    wm1w = jnp.zeros((16, H1), jnp.float32).at[:A].set(wm1[:, CNN_OUT:].T)
    # mlp[2] (256,128) and mlp[4] (128,1), both lane-padded to 256 columns
    wm2p = jnp.zeros((H1, LANES), jnp.float32).at[:, :H2].set(wm2.T)
    wm3p = jnp.zeros((LANES, LANES), jnp.float32).at[:H2, 0].set(wm3[0])
    wbig = jnp.concatenate([w1_big, w2_pad, wm1c, wm1w, wm2p, wm3p],
                           axis=0).astype(jnp.bfloat16)                   # (1968, 256)

    b2p = jnp.zeros((256,), jnp.float32).at[:C2].set(b2)
    bm2p = jnp.zeros((256,), jnp.float32).at[:H2].set(bm2)
    bm3p = jnp.zeros((256,), jnp.float32).at[0].set(bm3[0])
    biases = jnp.concatenate([jnp.tile(b1, A), b2p, bm1, bm2p, bm3p])[None, :]
    return wbig, jnp.asarray(biases, jnp.float32)                         # (1, 1280)


# ------------------------------- forward --------------------------------------
def critic_forward(market_image, current_weights, wbig, biases):
    """market_image: (B, F, T, A) NCHW as in PyTorch; current_weights: (B, A)."""
    # ---- activation glue (tiny, fuses in XLA): NCHW -> (B,T,A,F), 'same' pad,
    #      5-tap im2col, t-major rows (row = t*B + b), cols a*(K*F) + k*F + f.
    x = jnp.transpose(market_image, (0, 2, 3, 1))                     # (B,T,A,F)
    xp = jnp.pad(x, ((0, 0), (PAD, PAD), (0, 0), (0, 0)))             # (B,T+K-1,A,F)
    taps = jnp.stack([xp[:, k:k + T] for k in range(K)], axis=3)      # (B,T,A,K,F)
    xcol = jnp.transpose(taps, (1, 0, 2, 3, 4)).reshape(BT, AKF)
    xcol = xcol.astype(jnp.bfloat16)
    # fold current_weights into the same activation buffer (saves one DMA):
    cw_rows = jnp.zeros((B, AKF), jnp.bfloat16).at[:, :A].set(
        current_weights.astype(jnp.bfloat16))
    act = jnp.concatenate([xcol, cw_rows], axis=0)                    # (34, 160)

    vmem = pl.BlockSpec(memory_space=pltpu.MemorySpace.VMEM)
    out = pl.pallas_call(
        critic_kernel,
        out_shape=jax.ShapeDtypeStruct((B, OUT_W), jnp.float32),
        in_specs=[vmem, vmem, vmem],
        out_specs=vmem,
    )(act, wbig, biases)
    return out[:, :1]                                                 # (B, 1)


# --------------------------- pure-JAX reference -------------------------------
def reference(market_image, current_weights, params):
    w1t, b1, w2t, b2, wm1, bm1, wm2, bm2, wm3, bm3 = params
    y = lax.conv_general_dilated(market_image, w1t, (1, 1),
                                 padding=((PAD, PAD), (0, 0)),
                                 dimension_numbers=('NCHW', 'OIHW', 'NCHW'))
    y = jnp.maximum(y + b1.reshape(1, C1, 1, 1), 0.0)
    y = lax.conv_general_dilated(y, w2t, (1, 1),
                                 padding=((0, 0), (0, 0)),
                                 dimension_numbers=('NCHW', 'OIHW', 'NCHW'))
    y = jnp.maximum(y + b2.reshape(1, C2, 1, 1), 0.0)
    flat = y.reshape(B, -1)                                           # PyTorch Flatten order
    comb = jnp.concatenate([flat, current_weights], axis=1)
    z = jnp.maximum(comb @ wm1.T + bm1, 0.0)
    z = jnp.maximum(z @ wm2.T + bm2, 0.0)
    return z @ wm3.T + bm3


# ---------------------------------- main ---------------------------------------
if __name__ == "__main__":
    key = jax.random.PRNGKey(0)
    keys = jax.random.split(key, 12)

    def u(k, shape, fan_in):                                          # torch-style uniform init
        bound = 1.0 / np.sqrt(fan_in)
        return jax.random.uniform(k, shape, jnp.float32, -bound, bound)

    params = (
        u(keys[0], (C1, F, K, 1), F * K),                             # conv1.weight
        u(keys[1], (C1,), F * K),                                     # conv1.bias
        u(keys[2], (C2, C1, 1, A), C1 * A),                           # conv2.weight
        u(keys[3], (C2,), C1 * A),                                    # conv2.bias
        u(keys[4], (H1, CNN_OUT + A), CNN_OUT + A),                   # mlp[0].weight
        u(keys[5], (H1,), CNN_OUT + A),                               # mlp[0].bias
        u(keys[6], (H2, H1), H1),                                     # mlp[2].weight
        u(keys[7], (H2,), H1),                                        # mlp[2].bias
        u(keys[8], (1, H2), H2),                                      # mlp[4].weight
        u(keys[9], (1,), H2),                                         # mlp[4].bias
    )

    market_image = jax.random.normal(keys[10], (B, F, T, A), jnp.float32)
    current_weights = jax.nn.softmax(
        jax.random.normal(keys[11], (B, A), jnp.float32), axis=-1)

    # one-time packing (hoisted out of the per-call path)
    wbig, biases = pack_params(params)
    wbig, biases = jax.block_until_ready((wbig, biases))

    fwd = jax.jit(critic_forward)
    out = jax.block_until_ready(fwd(market_image, current_weights, wbig, biases))

    ref = reference(market_image, current_weights, params)
    # bf16 weights/activations with f32 accumulation -> loosened tolerance.
    np.testing.assert_allclose(np.asarray(out), np.asarray(ref),
                               rtol=2e-2, atol=2e-2)
    print("KERNEL_OK")
</pallas_src>

<mosaic_0001>
module attributes {stable_mosaic.version = 11 : i64} {
  func.func @critic_kernel(%arg0: memref<34x160xbf16, #tpu.memory_space<vmem>>, %arg1: memref<1968x256xbf16, #tpu.memory_space<vmem>>, %arg2: memref<1x1280xf32, #tpu.memory_space<vmem>>, %arg3: memref<2x256xf32, #tpu.memory_space<vmem>>) attributes {dimension_semantics = [], scalar_prefetch = 0 : i64, scratch_operands = 0 : i64, tpu.core_type = #tpu.core_type<tc>} {
    %c0 = arith.constant 0 : index
    %c0_0 = arith.constant 0 : index
    %0 = vector.load %arg0[%c0, %c0_0] : memref<34x160xbf16, #tpu.memory_space<vmem>>, vector<34x160xbf16>
    %1 = vector.extract_strided_slice %0 {offsets = [0, 0], sizes = [32, 160], strides = [1, 1]} : vector<34x160xbf16> to vector<32x160xbf16>
    %2 = vector.extract_strided_slice %0 {offsets = [32, 0], sizes = [2, 8], strides = [1, 1]} : vector<34x160xbf16> to vector<2x8xbf16>
    %c0_1 = arith.constant 0 : index
    %c0_2 = arith.constant 0 : index
    %3 = vector.load %arg1[%c0_1, %c0_2] : memref<1968x256xbf16, #tpu.memory_space<vmem>>, vector<160x256xbf16>
    %cst = arith.constant dense<0.000000e+00> : vector<32x256xf32>
    %4 = tpu.matmul %1, %3, %cst {dimension_numbers = #tpu.dot_dimension_numbers<[1], [0], [0], [1], [0, 0, 1, 1], [], []>} : vector<32x160xbf16>, vector<160x256xbf16>, vector<32x256xf32> -> vector<32x256xf32>
    %c0_3 = arith.constant 0 : index
    %c0_4 = arith.constant 0 : index
    %5 = vector.load %arg2[%c0_3, %c0_4] : memref<1x1280xf32, #tpu.memory_space<vmem>>, vector<1x256xf32>
    %6 = vector.broadcast %5 : vector<1x256xf32> to vector<32x256xf32>
    %7 = arith.addf %4, %6 : vector<32x256xf32>
    %cst_5 = arith.constant 0.000000e+00 : f32
    %8 = vector.broadcast %cst_5 : f32 to vector<32x256xf32>
    %9 = arith.maximumf %7, %8 : vector<32x256xf32>
    %10 = arith.truncf %9 : vector<32x256xf32> to vector<32x256xbf16>
    %c160 = arith.constant 160 : index
    %c0_6 = arith.constant 0 : index
    %11 = vector.load %arg1[%c160, %c0_6] : memref<1968x256xbf16, #tpu.memory_space<vmem>>, vector<256x256xbf16>
    %cst_7 = arith.constant dense<0.000000e+00> : vector<32x256xf32>
    %12 = tpu.matmul %10, %11, %cst_7 {dimension_numbers = #tpu.dot_dimension_numbers<[1], [0], [0], [1], [0, 0, 1, 1], [], []>} : vector<32x256xbf16>, vector<256x256xbf16>, vector<32x256xf32> -> vector<32x256xf32>
    %c0_8 = arith.constant 0 : index
    %c256 = arith.constant 256 : index
    %13 = vector.load %arg2[%c0_8, %c256] : memref<1x1280xf32, #tpu.memory_space<vmem>>, vector<1x256xf32>
    %14 = vector.broadcast %13 : vector<1x256xf32> to vector<32x256xf32>
    %15 = arith.addf %12, %14 : vector<32x256xf32>
    %cst_9 = arith.constant 0.000000e+00 : f32
    %16 = vector.broadcast %cst_9 : f32 to vector<32x256xf32>
    %17 = arith.maximumf %15, %16 : vector<32x256xf32>
    %18 = vector.extract_strided_slice %17 {offsets = [0, 0], sizes = [32, 64], strides = [1, 1]} : vector<32x256xf32> to vector<32x64xf32>
    %19 = arith.truncf %18 : vector<32x64xf32> to vector<32x64xbf16>
    %20 = vector.extract_strided_slice %19 {offsets = [0, 0], sizes = [2, 64], strides = [1, 1]} : vector<32x64xbf16> to vector<2x64xbf16>
    %21 = vector.extract_strided_slice %19 {offsets = [2, 0], sizes = [2, 64], strides = [1, 1]} : vector<32x64xbf16> to vector<2x64xbf16>
    %22 = vector.extract_strided_slice %19 {offsets = [4, 0], sizes = [2, 64], strides = [1, 1]} : vector<32x64xbf16> to vector<2x64xbf16>
    %23 = vector.extract_strided_slice %19 {offsets = [6, 0], sizes = [2, 64], strides = [1, 1]} : vector<32x64xbf16> to vector<2x64xbf16>
    %24 = vector.extract_strided_slice %19 {offsets = [8, 0], sizes = [2, 64], strides = [1, 1]} : vector<32x64xbf16> to vector<2x64xbf16>
    %25 = vector.extract_strided_slice %19 {offsets = [10, 0], sizes = [2, 64], strides = [1, 1]} : vector<32x64xbf16> to vector<2x64xbf16>
    %26 = vector.extract_strided_slice %19 {offsets = [12, 0], sizes = [2, 64], strides = [1, 1]} : vector<32x64xbf16> to vector<2x64xbf16>
    %27 = vector.extract_strided_slice %19 {offsets = [14, 0], sizes = [2, 64], strides = [1, 1]} : vector<32x64xbf16> to vector<2x64xbf16>
    %28 = vector.extract_strided_slice %19 {offsets = [16, 0], sizes = [2, 64], strides = [1, 1]} : vector<32x64xbf16> to vector<2x64xbf16>
    %29 = vector.extract_strided_slice %19 {offsets = [18, 0], sizes = [2, 64], strides = [1, 1]} : vector<32x64xbf16> to vector<2x64xbf16>
    %30 = vector.extract_strided_slice %19 {offsets = [20, 0], sizes = [2, 64], strides = [1, 1]} : vector<32x64xbf16> to vector<2x64xbf16>
    %31 = vector.extract_strided_slice %19 {offsets = [22, 0], sizes = [2, 64], strides = [1, 1]} : vector<32x64xbf16> to vector<2x64xbf16>
    %32 = vector.extract_strided_slice %19 {offsets = [24, 0], sizes = [2, 64], strides = [1, 1]} : vector<32x64xbf16> to vector<2x64xbf16>
    %33 = vector.extract_strided_slice %19 {offsets = [26, 0], sizes = [2, 64], strides = [1, 1]} : vector<32x64xbf16> to vector<2x64xbf16>
    %34 = vector.extract_strided_slice %19 {offsets = [28, 0], sizes = [2, 64], strides = [1, 1]} : vector<32x64xbf16> to vector<2x64xbf16>
    %35 = vector.extract_strided_slice %19 {offsets = [30, 0], sizes = [2, 64], strides = [1, 1]} : vector<32x64xbf16> to vector<2x64xbf16>
    %36 = tpu.concatenate %20, %21, %22, %23, %24, %25, %26, %27, %28, %29, %30, %31, %32, %33, %34, %35 in 1 : vector<2x64xbf16>, vector<2x64xbf16>, vector<2x64xbf16>, vector<2x64xbf16>, vector<2x64xbf16>, vector<2x64xbf16>, vector<2x64xbf16>, vector<2x64xbf16>, vector<2x64xbf16>, vector<2x64xbf16>, vector<2x64xbf16>, vector<2x64xbf16>, vector<2x64xbf16>, vector<2x64xbf16>, vector<2x64xbf16>, vector<2x64xbf16> -> vector<2x1024xbf16>
    %c416 = arith.constant 416 : index
    %c0_10 = arith.constant 0 : index
    %37 = vector.load %arg1[%c416, %c0_10] : memref<1968x256xbf16, #tpu.memory_space<vmem>>, vector<1024x256xbf16>
    %cst_11 = arith.constant dense<0.000000e+00> : vector<2x256xf32>
    %38 = tpu.matmul %36, %37, %cst_11 {dimension_numbers = #tpu.dot_dimension_numbers<[1], [0], [0], [1], [0, 0, 1, 1], [], []>} : vector<2x1024xbf16>, vector<1024x256xbf16>, vector<2x256xf32> -> vector<2x256xf32>
    %c1440 = arith.constant 1440 : index
    %c0_12 = arith.constant 0 : index
    %39 = vector.load %arg1[%c1440, %c0_12] : memref<1968x256xbf16, #tpu.memory_space<vmem>>, vector<8x256xbf16>
    %cst_13 = arith.constant dense<0.000000e+00> : vector<2x256xf32>
    %40 = tpu.matmul %2, %39, %cst_13 {dimension_numbers = #tpu.dot_dimension_numbers<[1], [0], [0], [1], [0, 0, 1, 1], [], []>} : vector<2x8xbf16>, vector<8x256xbf16>, vector<2x256xf32> -> vector<2x256xf32>
    %41 = arith.addf %38, %40 : vector<2x256xf32>
    %c0_14 = arith.constant 0 : index
    %c512 = arith.constant 512 : index
    %42 = vector.load %arg2[%c0_14, %c512] : memref<1x1280xf32, #tpu.memory_space<vmem>>, vector<1x256xf32>
    %43 = vector.broadcast %42 : vector<1x256xf32> to vector<2x256xf32>
    %44 = arith.addf %41, %43 : vector<2x256xf32>
    %cst_15 = arith.constant 0.000000e+00 : f32
    %45 = vector.broadcast %cst_15 : f32 to vector<2x256xf32>
    %46 = arith.maximumf %44, %45 : vector<2x256xf32>
    %47 = arith.truncf %46 : vector<2x256xf32> to vector<2x256xbf16>
    %c1456 = arith.constant 1456 : index
    %c0_16 = arith.constant 0 : index
    %48 = vector.load %arg1[%c1456, %c0_16] : memref<1968x256xbf16, #tpu.memory_space<vmem>>, vector<256x256xbf16>
    %cst_17 = arith.constant dense<0.000000e+00> : vector<2x256xf32>
    %49 = tpu.matmul %47, %48, %cst_17 {dimension_numbers = #tpu.dot_dimension_numbers<[1], [0], [0], [1], [0, 0, 1, 1], [], []>} : vector<2x256xbf16>, vector<256x256xbf16>, vector<2x256xf32> -> vector<2x256xf32>
    %c0_18 = arith.constant 0 : index
    %c768 = arith.constant 768 : index
    %50 = vector.load %arg2[%c0_18, %c768] : memref<1x1280xf32, #tpu.memory_space<vmem>>, vector<1x256xf32>
    %51 = vector.broadcast %50 : vector<1x256xf32> to vector<2x256xf32>
    %52 = arith.addf %49, %51 : vector<2x256xf32>
    %cst_19 = arith.constant 0.000000e+00 : f32
    %53 = vector.broadcast %cst_19 : f32 to vector<2x256xf32>
    %54 = arith.maximumf %52, %53 : vector<2x256xf32>
    %55 = arith.truncf %54 : vector<2x256xf32> to vector<2x256xbf16>
    %c1712 = arith.constant 1712 : index
    %c0_20 = arith.constant 0 : index
    %56 = vector.load %arg1[%c1712, %c0_20] : memref<1968x256xbf16, #tpu.memory_space<vmem>>, vector<256x256xbf16>
    %cst_21 = arith.constant dense<0.000000e+00> : vector<2x256xf32>
    %57 = tpu.matmul %55, %56, %cst_21 {dimension_numbers = #tpu.dot_dimension_numbers<[1], [0], [0], [1], [0, 0, 1, 1], [], []>} : vector<2x256xbf16>, vector<256x256xbf16>, vector<2x256xf32> -> vector<2x256xf32>
    %c0_22 = arith.constant 0 : index
    %c1024 = arith.constant 1024 : index
    %58 = vector.load %arg2[%c0_22, %c1024] : memref<1x1280xf32, #tpu.memory_space<vmem>>, vector<1x256xf32>
    %59 = vector.broadcast %58 : vector<1x256xf32> to vector<2x256xf32>
    %60 = arith.addf %57, %59 : vector<2x256xf32>
    %c0_23 = arith.constant 0 : index
    %c0_24 = arith.constant 0 : index
    %61 = vector.load %arg3[%c0_23, %c0_24] : memref<2x256xf32, #tpu.memory_space<vmem>>, vector<2x256xf32>
    tpu.vector_store %arg3[%c0_23, %c0_24], %60 {strides = array<i32>} : memref<2x256xf32, #tpu.memory_space<vmem>>, vector<2x256xf32>,
    return
  }
}

</mosaic_0001>

<llo_original>
// kernel: critic_forward.1
$region0: #{critic_forward.1}
  #allocation0 [shape = 'u32[]', space=smem, size = 0x4, offset = 0x4, fixed_abs, tag = 'smem constant byte address 0x4 - core index']
  #allocation1 [shape = 'u32[144,128]{1,0:T(1,128)}', space=vmem, size = 0x12000, scoped, tag = 'internal scratch']
  %s0 = inlined_call_operand.vmem [shape: bf16[34,160], index: 0, kind: input, shape index: {}]
  %s1 = inlined_call_operand.vmem [shape: bf16[1968,256], index: 1, kind: input, shape index: {}]
  %s2 = inlined_call_operand.vmem [shape: f32[1,1280], index: 2, kind: input, shape index: {}]
  %s3 = inlined_call_operand.vmem [shape: f32[2,256], index: 3, kind: output, shape index: {}]
  %s4 = sld [smem:[#allocation0]]
  $region22: #{critic_forward.1} parent=0
    _
  %s6 = ssub.s32 1, %s4
  %s7 = scalar_select 0, %s6, %s4
  // Predicated region
  $region2: #{critic_forward.1} parent=0 // pred_check
    _
  $region3: #{critic_forward.1} parent=0 // pred_check_branch
    %9 = sbr.rel (0) target = $region5
  $region4: #{critic_forward.1} parent=0 // pred_region
    _
  $region5: #{critic_forward.1} parent=0 // pred_fallthru
    _
  // Predicated region
  $region6: #{critic_forward.1} parent=0 // pred_check
    _
  $region7: #{critic_forward.1} parent=0 // pred_check_branch
    %11 = sbr.rel (0) target = $region9
  $region8: #{critic_forward.1} parent=0 // pred_region
    _
  $region9: #{critic_forward.1} parent=0 // pred_fallthru
    _
  // Predicated region
  $region10: #{critic_forward.1} parent=0 // pred_check
    _
  $region11: #{critic_forward.1} parent=0 // pred_check_branch
    %13 = sbr.rel (0) target = $region13
  $region12: #{critic_forward.1} parent=0 // pred_region
    _
  $region13: #{critic_forward.1} parent=0 // pred_fallthru
    _
  %v15 = vld [vmem:[%s0] sm:$0xff]
  %v16 = vld [vmem:[%s0 + $0x8] sm:$0xff]
  %v17 = vld [vmem:[%s0 + $0x10] sm:$0xff]
  %v18 = vld [vmem:[%s0 + $0x18] sm:$0xff]
  %v19 = vld [vmem:[%s0 + $0x20] sm:$0x11]
  %v20 = vld [vmem:[%s1] sm:$0xff]
  %v21 = vld [vmem:[%s1 + $0x8] sm:$0xff]
  %v22 = vld [vmem:[%s1 + $0x10] sm:$0xff]
  %v23 = vld [vmem:[%s1 + $0x18] sm:$0xff]
  %v24 = vld [vmem:[%s1 + $0x20] sm:$0xff]
  %v25 = vld [vmem:[%s1 + $0x28] sm:$0xff]
  %v26 = vld [vmem:[%s1 + $0x30] sm:$0xff]
  %v27 = vld [vmem:[%s1 + $0x38] sm:$0xff]
  %v28 = vld [vmem:[%s1 + $0x40] sm:$0xff]
  %v29 = vld [vmem:[%s1 + $0x48] sm:$0xff]
  %v30 = vld [vmem:[%s1 + $0x50] sm:$0xff]
  %v31 = vld [vmem:[%s1 + $0x58] sm:$0xff]
  %v32 = vld [vmem:[%s1 + $0x60] sm:$0xff]
  %v33 = vld [vmem:[%s1 + $0x68] sm:$0xff]
  %v34 = vld [vmem:[%s1 + $0x70] sm:$0xff]
  %v35 = vld [vmem:[%s1 + $0x78] sm:$0xff]
  %v36 = vld [vmem:[%s1 + $0x80] sm:$0xff]
  %v37 = vld [vmem:[%s1 + $0x88] sm:$0xff]
  %v38 = vld [vmem:[%s1 + $0x90] sm:$0xff]
  %v39 = vld [vmem:[%s1 + $0x98] sm:$0xff]
  %v40 = vld [vmem:[%s2] sm:$0x3]
  %v42 = vlaneseq
  %v43 = vshrl.u32 %v42, 7
  %v44 = vsub.s32 0, %v43
  %v45 = vrot.slane %v40, %v44
  %v46 = vlaneseq
  %v47 = vshrl.u32 %v46, 7
  %v48 = vsub.s32 1, %v47
  %v49 = vrot.slane %v40, %v48
  %v56 = vunpack.c.l.b16 %v15
  %v57 = vunpack.c.h.b16 %v15
  %v58 = vunpack.c.l.b16 %v16
  %v59 = vunpack.c.h.b16 %v16
  %v60 = vunpack.c.l.b16 %v17
  %v61 = vunpack.c.h.b16 %v17
  %v62 = vunpack.c.l.b16 %v18
  %v63 = vunpack.c.h.b16 %v18
  %v64 = vpack.c.b16 %v58, %v56
  %v65 = vpack.c.b16 %v59, %v57
  %v66 = vpack.c.b16 %v62, %v60
  %v67 = vpack.c.b16 %v63, %v61
  %v90 = vunpack.c.l.b16 %v20
  %v91 = vunpack.c.h.b16 %v20
  %v92 = vunpack.c.l.b16 %v21
  %v93 = vunpack.c.h.b16 %v21
  %v94 = vunpack.c.l.b16 %v22
  %v95 = vunpack.c.h.b16 %v22
  %v96 = vunpack.c.l.b16 %v23
  %v97 = vunpack.c.h.b16 %v23
  %v98 = vunpack.c.l.b16 %v24
  %v99 = vunpack.c.h.b16 %v24
  %v100 = vunpack.c.l.b16 %v25
  %v101 = vunpack.c.h.b16 %v25
  %v102 = vunpack.c.l.b16 %v26
  %v103 = vunpack.c.h.b16 %v26
  %v104 = vunpack.c.l.b16 %v27
  %v105 = vunpack.c.h.b16 %v27
  %v106 = vunpack.c.l.b16 %v28
  %v107 = vunpack.c.h.b16 %v28
  %v108 = vunpack.c.l.b16 %v29
  %v109 = vunpack.c.h.b16 %v29
  %v110 = vunpack.c.l.b16 %v30
  %v111 = vunpack.c.h.b16 %v30
  %v112 = vunpack.c.l.b16 %v31
  %v113 = vunpack.c.h.b16 %v31
  %v114 = vunpack.c.l.b16 %v32
  %v115 = vunpack.c.h.b16 %v32
  %v116 = vunpack.c.l.b16 %v33
  %v117 = vunpack.c.h.b16 %v33
  %v118 = vunpack.c.l.b16 %v34
  %v119 = vunpack.c.h.b16 %v34
  %v120 = vunpack.c.l.b16 %v35
  %v121 = vunpack.c.h.b16 %v35
  %v122 = vunpack.c.l.b16 %v36
  %v123 = vunpack.c.h.b16 %v36
  %v124 = vunpack.c.l.b16 %v37
  %v125 = vunpack.c.h.b16 %v37
  %v126 = vunpack.c.l.b16 %v38
  %v127 = vunpack.c.h.b16 %v38
  %v128 = vunpack.c.l.b16 %v39
  %v129 = vunpack.c.h.b16 %v39
  %v130 = vpack.c.b16 %v92, %v90
  %v131 = vpack.c.b16 %v93, %v91
  %v132 = vpack.c.b16 %v96, %v94
  %v133 = vpack.c.b16 %v97, %v95
  %v134 = vpack.c.b16 %v100, %v98
  %v135 = vpack.c.b16 %v101, %v99
  %v136 = vpack.c.b16 %v104, %v102
  %v137 = vpack.c.b16 %v105, %v103
  %v138 = vpack.c.b16 %v108, %v106
  %v139 = vpack.c.b16 %v109, %v107
  %v140 = vpack.c.b16 %v112, %v110
  %v141 = vpack.c.b16 %v113, %v111
  %v142 = vpack.c.b16 %v116, %v114
  %v143 = vpack.c.b16 %v117, %v115
  %v144 = vpack.c.b16 %v120, %v118
  %v145 = vpack.c.b16 %v121, %v119
  %v146 = vpack.c.b16 %v124, %v122
  %v147 = vpack.c.b16 %v125, %v123
  %v148 = vpack.c.b16 %v128, %v126
  %v149 = vpack.c.b16 %v129, %v127
  %vm170 = vcmask 261120
  %v172 = vsel %vm170, %v65, 0
  %v175 = vsel %vm170, %v67, 0
  %177 = vmatprep.subr.bf16.mxu0 %v131
  %178 = vmatpush1.bf16.msra.mxu0 %v130
  %179 = vmatprep.subr.bf16.mxu0 %v133
  %180 = vmatpush1.bf16.msra.mxu0 %v132
  %181 = vmatprep.subr.bf16.mxu0 %v135
  %182 = vmatpush1.bf16.msra.mxu0 %v134
  %183 = vmatprep.subr.bf16.mxu0 %v137
  %184 = vmatpush1.bf16.msra.mxu0 %v136
  %185 = vmatprep.subr.bf16.mxu0 %v139
  %186 = vmatpush1.bf16.msra.mxu0 %v138
  %187 = vmatprep.subr.bf16.mxu0 %v141
  %188 = vmatpush1.bf16.msra.mxu0 %v140
  %189 = vmatprep.subr.bf16.mxu0 %v143
  %190 = vmatpush1.bf16.msra.mxu0 %v142
  %191 = vmatprep.subr.bf16.mxu0 %v145
  %192 = vmatpush1.bf16.msra.mxu0 %v144
  %193 = vmatprep.subr.bf16.mxu0 %v147
  %194 = vmatpush1.bf16.msra.mxu0 %v146
  %195 = vmatprep.subr.bf16.mxu0 %v149
  %196 = vmatpush1.bf16.msra.mxu0 %v148
  %197 = vmatprep.subr.bf16.mxu0 0
  %198 = vmatpush1.bf16.msra.mxu0 0
  %199 = vmatprep.subr.bf16.mxu0 0
  %200 = vmatpush1.bf16.msra.mxu0 0
  %201 = vmatprep.subr.bf16.mxu0 0
  %202 = vmatpush1.bf16.msra.mxu0 0
  %203 = vmatprep.subr.bf16.mxu0 0
  %204 = vmatpush1.bf16.msra.mxu0 0
  %205 = vmatprep.subr.bf16.mxu0 0
  %206 = vmatpush1.bf16.msra.mxu0 0
  %207 = vmatprep.subr.bf16.mxu0 0
  %208 = vmatpush1.bf16.msra.mxu0 0
  %209 = vmatprep.mubr.bf16.mxu0 %v172
  %210 = vmatmul.mubr.bf16.gmra.mrb[0].mxu0 %v64
  %v211 = vpop.f32.mrb[0].mxu0
  %v212 = vadd.f32 %v45, %v211
  %v213 = vpop.f32.mrb[0].mxu0
  %v214 = vadd.f32 %v49, %v213
  %v215 = vpop.f32.mrb[0].mxu0
  %v216 = vadd.f32 %v45, %v215
  %v217 = vpop.f32.mrb[0].mxu0
  %v218 = vadd.f32 %v49, %v217
  %219 = vmatprep.mubr.bf16.mxu0 %v175
  %220 = vmatmul.mubr.bf16.gmra.mrb[0].mxu0 %v66
  %v221 = vpop.f32.mrb[0].mxu0
  %v222 = vadd.f32 %v45, %v221
  %v223 = vpop.f32.mrb[0].mxu0
  %v224 = vadd.f32 %v49, %v223
  %v225 = vpop.f32.mrb[0].mxu0
  %v226 = vadd.f32 %v45, %v225
  %v227 = vpop.f32.mrb[0].mxu0
  %v228 = vadd.f32 %v49, %v227
  %229 = vdwg.mxu0
  %v230 = vmax.f32 %v212, 0.0
  %v231 = vmax.f32 %v214, 0.0
  %v232 = vmax.f32 %v216, 0.0
  %v233 = vmax.f32 %v218, 0.0
  %v234 = vmax.f32 %v222, 0.0
  %v235 = vmax.f32 %v224, 0.0
  %v236 = vmax.f32 %v226, 0.0
  %v237 = vmax.f32 %v228, 0.0
  %v238 = vpack.c.bf16 %v232, %v230
  %v239 = vpack.c.bf16 %v233, %v231
  %v240 = vpack.c.bf16 %v236, %v234
  %v241 = vpack.c.bf16 %v237, %v235
  %v242 = vld [vmem:[%s1 + $0xa0] sm:$0xff]
  %v243 = vld [vmem:[%s1 + $0xa8] sm:$0xff]
  %v244 = vld [vmem:[%s1 + $0xb0] sm:$0xff]
  %v245 = vld [vmem:[%s1 + $0xb8] sm:$0xff]
  %v246 = vld [vmem:[%s1 + $0xc0] sm:$0xff]
  %v247 = vld [vmem:[%s1 + $0xc8] sm:$0xff]
  %v248 = vld [vmem:[%s1 + $0xd0] sm:$0xff]
  %v249 = vld [vmem:[%s1 + $0xd8] sm:$0xff]
  %v250 = vld [vmem:[%s1 + $0xe0] sm:$0xff]
  %v251 = vld [vmem:[%s1 + $0xe8] sm:$0xff]
  %v252 = vld [vmem:[%s1 + $0xf0] sm:$0xff]
  %v253 = vld [vmem:[%s1 + $0xf8] sm:$0xff]
  %v254 = vld [vmem:[%s1 + $0x100] sm:$0xff]
  %v255 = vld [vmem:[%s1 + $0x108] sm:$0xff]
  %v256 = vld [vmem:[%s1 + $0x110] sm:$0xff]
  %v257 = vld [vmem:[%s1 + $0x118] sm:$0xff]
  %v258 = vld [vmem:[%s1 + $0x120] sm:$0xff]
  %v259 = vld [vmem:[%s1 + $0x128] sm:$0xff]
  %v260 = vld [vmem:[%s1 + $0x130] sm:$0xff]
  %v261 = vld [vmem:[%s1 + $0x138] sm:$0xff]
  %v262 = vld [vmem:[%s1 + $0x140] sm:$0xff]
  %v263 = vld [vmem:[%s1 + $0x148] sm:$0xff]
  %v264 = vld [vmem:[%s1 + $0x150] sm:$0xff]
  %v265 = vld [vmem:[%s1 + $0x158] sm:$0xff]
  %v266 = vld [vmem:[%s1 + $0x160] sm:$0xff]
  %v267 = vld [vmem:[%s1 + $0x168] sm:$0xff]
  %v268 = vld [vmem:[%s1 + $0x170] sm:$0xff]
  %v269 = vld [vmem:[%s1 + $0x178] sm:$0xff]
  %v270 = vld [vmem:[%s1 + $0x180] sm:$0xff]
  %v271 = vld [vmem:[%s1 + $0x188] sm:$0xff]
  %v272 = vld [vmem:[%s1 + $0x190] sm:$0xff]
  %v273 = vld [vmem:[%s1 + $0x198] sm:$0xff]
  %v274 = vld [vmem:[%s2 + $0x2] sm:$0x3]
  %v276 = vlaneseq
  %v277 = vshrl.u32 %v276, 7
  %v278 = vsub.s32 0, %v277
  %v279 = vrot.slane %v274, %v278
  %v313 = vunpack.c.l.b16 %v242
  %v314 = vunpack.c.h.b16 %v242
  %v315 = vunpack.c.l.b16 %v243
  %v316 = vunpack.c.h.b16 %v243
  %v317 = vunpack.c.l.b16 %v244
  %v318 = vunpack.c.h.b16 %v244
  %v319 = vunpack.c.l.b16 %v245
  %v320 = vunpack.c.h.b16 %v245
  %v321 = vunpack.c.l.b16 %v246
  %v322 = vunpack.c.h.b16 %v246
  %v323 = vunpack.c.l.b16 %v247
  %v324 = vunpack.c.h.b16 %v247
  %v325 = vunpack.c.l.b16 %v248
  %v326 = vunpack.c.h.b16 %v248
  %v327 = vunpack.c.l.b16 %v249
  %v328 = vunpack.c.h.b16 %v249
  %v329 = vunpack.c.l.b16 %v250
  %v330 = vunpack.c.h.b16 %v250
  %v331 = vunpack.c.l.b16 %v251
  %v332 = vunpack.c.h.b16 %v251
  %v333 = vunpack.c.l.b16 %v252
  %v334 = vunpack.c.h.b16 %v252
  %v335 = vunpack.c.l.b16 %v253
  %v336 = vunpack.c.h.b16 %v253
  %v337 = vunpack.c.l.b16 %v254
  %v338 = vunpack.c.h.b16 %v254
  %v339 = vunpack.c.l.b16 %v255
  %v340 = vunpack.c.h.b16 %v255
  %v341 = vunpack.c.l.b16 %v256
  %v342 = vunpack.c.h.b16 %v256
  %v343 = vunpack.c.l.b16 %v257
  %v344 = vunpack.c.h.b16 %v257
  %v345 = vunpack.c.l.b16 %v258
  %v346 = vunpack.c.h.b16 %v258
  %v347 = vunpack.c.l.b16 %v259
  %v348 = vunpack.c.h.b16 %v259
  %v349 = vunpack.c.l.b16 %v260
  %v350 = vunpack.c.h.b16 %v260
  %v351 = vunpack.c.l.b16 %v261
  %v352 = vunpack.c.h.b16 %v261
  %v353 = vunpack.c.l.b16 %v262
  %v354 = vunpack.c.h.b16 %v262
  %v355 = vunpack.c.l.b16 %v263
  %v356 = vunpack.c.h.b16 %v263
  %v357 = vunpack.c.l.b16 %v264
  %v358 = vunpack.c.h.b16 %v264
  %v359 = vunpack.c.l.b16 %v265
  %v360 = vunpack.c.h.b16 %v265
  %v361 = vunpack.c.l.b16 %v266
  %v362 = vunpack.c.h.b16 %v266
  %v363 = vunpack.c.l.b16 %v267
  %v364 = vunpack.c.h.b16 %v267
  %v365 = vunpack.c.l.b16 %v268
  %v366 = vunpack.c.h.b16 %v268
  %v367 = vunpack.c.l.b16 %v269
  %v368 = vunpack.c.h.b16 %v269
  %v369 = vunpack.c.l.b16 %v270
  %v370 = vunpack.c.h.b16 %v270
  %v371 = vunpack.c.l.b16 %v271
  %v372 = vunpack.c.h.b16 %v271
  %v373 = vunpack.c.l.b16 %v272
  %v374 = vunpack.c.h.b16 %v272
  %v375 = vunpack.c.l.b16 %v273
  %v376 = vunpack.c.h.b16 %v273
  %v377 = vpack.c.b16 %v315, %v313
  %v378 = vpack.c.b16 %v316, %v314
  %v379 = vpack.c.b16 %v319, %v317
  %v380 = vpack.c.b16 %v320, %v318
  %v381 = vpack.c.b16 %v323, %v321
  %v382 = vpack.c.b16 %v324, %v322
  %v383 = vpack.c.b16 %v327, %v325
  %v384 = vpack.c.b16 %v328, %v326
  %v385 = vpack.c.b16 %v331, %v329
  %v386 = vpack.c.b16 %v332, %v330
  %v387 = vpack.c.b16 %v335, %v333
  %v388 = vpack.c.b16 %v336, %v334
  %v389 = vpack.c.b16 %v339, %v337
  %v390 = vpack.c.b16 %v340, %v338
  %v391 = vpack.c.b16 %v343, %v341
  %v392 = vpack.c.b16 %v344, %v342
  %v393 = vpack.c.b16 %v347, %v345
  %v394 = vpack.c.b16 %v348, %v346
  %v395 = vpack.c.b16 %v351, %v349
  %v396 = vpack.c.b16 %v352, %v350
  %v397 = vpack.c.b16 %v355, %v353
  %v398 = vpack.c.b16 %v356, %v354
  %v399 = vpack.c.b16 %v359, %v357
  %v400 = vpack.c.b16 %v360, %v358
  %v401 = vpack.c.b16 %v363, %v361
  %v402 = vpack.c.b16 %v364, %v362
  %v403 = vpack.c.b16 %v367, %v365
  %v404 = vpack.c.b16 %v368, %v366
  %v405 = vpack.c.b16 %v371, %v369
  %v406 = vpack.c.b16 %v372, %v370
  %v407 = vpack.c.b16 %v375, %v373
  %v408 = vpack.c.b16 %v376, %v374
  %441 = vmatprep.subr.bf16.mxu0 %v378
  %442 = vmatpush1.bf16.msra.mxu0 %v377
  %443 = vmatprep.subr.bf16.mxu0 %v380
  %444 = vmatpush1.bf16.msra.mxu0 %v379
  %445 = vmatprep.subr.bf16.mxu0 %v382
  %446 = vmatpush1.bf16.msra.mxu0 %v381
  %447 = vmatprep.subr.bf16.mxu0 %v384
  %448 = vmatpush1.bf16.msra.mxu0 %v383
  %449 = vmatprep.subr.bf16.mxu0 %v386
  %450 = vmatpush1.bf16.msra.mxu0 %v385
  %451 = vmatprep.subr.bf16.mxu0 %v388
  %452 = vmatpush1.bf16.msra.mxu0 %v387
  %453 = vmatprep.subr.bf16.mxu0 %v390
  %454 = vmatpush1.bf16.msra.mxu0 %v389
  %455 = vmatprep.subr.bf16.mxu0 %v392
  %456 = vmatpush1.bf16.msra.mxu0 %v391
  %457 = vmatprep.subr.bf16.mxu0 %v394
  %458 = vmatpush1.bf16.msra.mxu0 %v393
  %459 = vmatprep.subr.bf16.mxu0 %v396
  %460 = vmatpush1.bf16.msra.mxu0 %v395
  %461 = vmatprep.subr.bf16.mxu0 %v398
  %462 = vmatpush1.bf16.msra.mxu0 %v397
  %463 = vmatprep.subr.bf16.mxu0 %v400
  %464 = vmatpush1.bf16.msra.mxu0 %v399
  %465 = vmatprep.subr.bf16.mxu0 %v402
  %466 = vmatpush1.bf16.msra.mxu0 %v401
  %467 = vmatprep.subr.bf16.mxu0 %v404
  %468 = vmatpush1.bf16.msra.mxu0 %v403
  %469 = vmatprep.subr.bf16.mxu0 %v406
  %470 = vmatpush1.bf16.msra.mxu0 %v405
  %471 = vmatprep.subr.bf16.mxu0 %v408
  %472 = vmatpush1.bf16.msra.mxu0 %v407
  %473 = vmatprep.mubr.bf16.mxu0 %v239
  %474 = vmatmul.mubr.bf16.gmra.mrb[0].mxu0 %v238
  %v475 = vpop.f32.mrb[0].mxu0
  %v476 = vadd.f32 %v279, %v475
  %v477 = vpop.f32.mrb[0].mxu0
  %v478 = vpop.f32.mrb[0].mxu0
  %v479 = vadd.f32 %v279, %v478
  %v480 = vpop.f32.mrb[0].mxu0
  %481 = vmatprep.mubr.bf16.mxu0 %v241
  %482 = vmatmul.mubr.bf16.gmra.mrb[0].mxu0 %v240
  %v483 = vpop.f32.mrb[0].mxu0
  %v484 = vadd.f32 %v279, %v483
  %v485 = vpop.f32.mrb[0].mxu0
  %v486 = vpop.f32.mrb[0].mxu0
  %v487 = vadd.f32 %v279, %v486
  %v488 = vpop.f32.mrb[0].mxu0
  %489 = vdwg.mxu0
  %v490 = vmax.f32 %v476, 0.0
  %v491 = vmax.f32 %v479, 0.0
  %v492 = vmax.f32 %v484, 0.0
  %v493 = vmax.f32 %v487, 0.0
  %v494 = vpack.c.bf16 %v491, %v490
  %v495 = vpack.c.bf16 %v493, %v492
  %v497 = vrot.slane %v494, 1
  %498 = vrot.lane.b32.xlu0 %v497, 64
  %v499 = vpop.permute.xlu0 %498
  %v500 = vrot.slane %v494, 2
  %v501 = vrot.slane %v494, 3
  %502 = vrot.lane.b32.xlu0 %v501, 64
  %v503 = vpop.permute.xlu0 %502
  %v504 = vrot.slane %v494, 4
  %v505 = vrot.slane %v494, 5
  %506 = vrot.lane.b32.xlu0 %v505, 64
  %v507 = vpop.permute.xlu0 %506
  %v508 = vrot.slane %v494, 6
  %v509 = vrot.slane %v494, 7
  %510 = vrot.lane.b32.xlu0 %v509, 64
  %v511 = vpop.permute.xlu0 %510
  %v513 = vrot.slane %v495, 1
  %514 = vrot.lane.b32.xlu0 %v513, 64
  %v515 = vpop.permute.xlu0 %514
  %v516 = vrot.slane %v495, 2
  %v517 = vrot.slane %v495, 3
  %518 = vrot.lane.b32.xlu0 %v517, 64
  %v519 = vpop.permute.xlu0 %518
  %v520 = vrot.slane %v495, 4
  %v521 = vrot.slane %v495, 5
  %522 = vrot.lane.b32.xlu0 %v521, 64
  %v523 = vpop.permute.xlu0 %522
  %v524 = vrot.slane %v495, 6
  %v525 = vrot.slane %v495, 7
  %526 = vrot.lane.b32.xlu0 %v525, 64
  %v527 = vpop.permute.xlu0 %526
  %vm528 = vcmask 523264
  %v531 = vsel %vm528, %v494, %v499
  %v535 = vsel %vm528, %v500, %v503
  %v539 = vsel %vm528, %v504, %v507
  %v543 = vsel %vm528, %v508, %v511
  %v547 = vsel %vm528, %v495, %v515
  %v551 = vsel %vm528, %v516, %v519
  %v555 = vsel %vm528, %v520, %v523
  %v559 = vsel %vm528, %v524, %v527
  %v561 = vld [vmem:[%s1 + $0x1a0] sm:$0xff]
  %v562 = vld [vmem:[%s1 + $0x1a8] sm:$0xff]
  %v563 = vld [vmem:[%s1 + $0x1b0] sm:$0xff]
  %v564 = vld [vmem:[%s1 + $0x1b8] sm:$0xff]
  %v565 = vld [vmem:[%s1 + $0x1c0] sm:$0xff]
  %v566 = vld [vmem:[%s1 + $0x1c8] sm:$0xff]
  %v567 = vld [vmem:[%s1 + $0x1d0] sm:$0xff]
  %v568 = vld [vmem:[%s1 + $0x1d8] sm:$0xff]
  %v569 = vld [vmem:[%s1 + $0x1e0] sm:$0xff]
  %v570 = vld [vmem:[%s1 + $0x1e8] sm:$0xff]
  %v571 = vld [vmem:[%s1 + $0x1f0] sm:$0xff]
  %v572 = vld [vmem:[%s1 + $0x1f8] sm:$0xff]
  %v573 = vld [vmem:[%s1 + $0x200] sm:$0xff]
  %v574 = vld [vmem:[%s1 + $0x208] sm:$0xff]
  %v575 = vld [vmem:[%s1 + $0x210] sm:$0xff]
  %v576 = vld [vmem:[%s1 + $0x218] sm:$0xff]
  %v577 = vld [vmem:[%s1 + $0x220] sm:$0xff]
  %v578 = vld [vmem:[%s1 + $0x228] sm:$0xff]
  %v579 = vld [vmem:[%s1 + $0x230] sm:$0xff]
  %v580 = vld [vmem:[%s1 + $0x238] sm:$0xff]
  %v581 = vld [vmem:[%s1 + $0x240] sm:$0xff]
  %v582 = vld [vmem:[%s1 + $0x248] sm:$0xff]
  %v583 = vld [vmem:[%s1 + $0x250] sm:$0xff]
  %v584 = vld [vmem:[%s1 + $0x258] sm:$0xff]
  %v585 = vld [vmem:[%s1 + $0x260] sm:$0xff]
  %v586 = vld [vmem:[%s1 + $0x268] sm:$0xff]
  %v587 = vld [vmem:[%s1 + $0x270] sm:$0xff]
  %v588 = vld [vmem:[%s1 + $0x278] sm:$0xff]
  %v589 = vld [vmem:[%s1 + $0x280] sm:$0xff]
  %v590 = vld [vmem:[%s1 + $0x288] sm:$0xff]
  %v591 = vld [vmem:[%s1 + $0x290] sm:$0xff]
  %v592 = vld [vmem:[%s1 + $0x298] sm:$0xff]
  %v593 = vld [vmem:[%s1 + $0x2a0] sm:$0xff]
  %v594 = vld [vmem:[%s1 + $0x2a8] sm:$0xff]
  %v595 = vld [vmem:[%s1 + $0x2b0] sm:$0xff]
  %v596 = vld [vmem:[%s1 + $0x2b8] sm:$0xff]
  %v597 = vld [vmem:[%s1 + $0x2c0] sm:$0xff]
  %v598 = vld [vmem:[%s1 + $0x2c8] sm:$0xff]
  %v599 = vld [vmem:[%s1 + $0x2d0] sm:$0xff]
  %v600 = vld [vmem:[%s1 + $0x2d8] sm:$0xff]
  %v601 = vld [vmem:[%s1 + $0x2e0] sm:$0xff]
  %v602 = vld [vmem:[%s1 + $0x2e8] sm:$0xff]
  %v603 = vld [vmem:[%s1 + $0x2f0] sm:$0xff]
  %v604 = vld [vmem:[%s1 + $0x2f8] sm:$0xff]
  %v605 = vld [vmem:[%s1 + $0x300] sm:$0xff]
  %v606 = vld [vmem:[%s1 + $0x308] sm:$0xff]
  %v607 = vld [vmem:[%s1 + $0x310] sm:$0xff]
  %v608 = vld [vmem:[%s1 + $0x318] sm:$0xff]
  %v609 = vld [vmem:[%s1 + $0x320] sm:$0xff]
  %v610 = vld [vmem:[%s1 + $0x328] sm:$0xff]
  %v611 = vld [vmem:[%s1 + $0x330] sm:$0xff]
  %v612 = vld [vmem:[%s1 + $0x338] sm:$0xff]
  %v613 = vld [vmem:[%s1 + $0x340] sm:$0xff]
  %v614 = vld [vmem:[%s1 + $0x348] sm:$0xff]
  %v615 = vld [vmem:[%s1 + $0x350] sm:$0xff]
  %v616 = vld [vmem:[%s1 + $0x358] sm:$0xff]
  %v617 = vld [vmem:[%s1 + $0x360] sm:$0xff]
  %v618 = vld [vmem:[%s1 + $0x368] sm:$0xff]
  %v619 = vld [vmem:[%s1 + $0x370] sm:$0xff]
  %v620 = vld [vmem:[%s1 + $0x378] sm:$0xff]
  %v621 = vld [vmem:[%s1 + $0x380] sm:$0xff]
  %v622 = vld [vmem:[%s1 + $0x388] sm:$0xff]
  %v623 = vld [vmem:[%s1 + $0x390] sm:$0xff]
  %v624 = vld [vmem:[%s1 + $0x398] sm:$0xff]
  %v625 = vld [vmem:[%s1 + $0x3a0] sm:$0xff]
  %v626 = vld [vmem:[%s1 + $0x3a8] sm:$0xff]
  %v627 = vld [vmem:[%s1 + $0x3b0] sm:$0xff]
  %v628 = vld [vmem:[%s1 + $0x3b8] sm:$0xff]
  %v629 = vld [vmem:[%s1 + $0x3c0] sm:$0xff]
  %v630 = vld [vmem:[%s1 + $0x3c8] sm:$0xff]
  %v631 = vld [vmem:[%s1 + $0x3d0] sm:$0xff]
  %v632 = vld [vmem:[%s1 + $0x3d8] sm:$0xff]
  %v633 = vld [vmem:[%s1 + $0x3e0] sm:$0xff]
  %v634 = vld [vmem:[%s1 + $0x3e8] sm:$0xff]
  %v635 = vld [vmem:[%s1 + $0x3f0] sm:$0xff]
  %v636 = vld [vmem:[%s1 + $0x3f8] sm:$0xff]
  %v637 = vld [vmem:[%s1 + $0x400] sm:$0xff]
  %v638 = vld [vmem:[%s1 + $0x408] sm:$0xff]
  %v639 = vld [vmem:[%s1 + $0x410] sm:$0xff]
  %v640 = vld [vmem:[%s1 + $0x418] sm:$0xff]
  %v641 = vld [vmem:[%s1 + $0x420] sm:$0xff]
  %v642 = vld [vmem:[%s1 + $0x428] sm:$0xff]
  %v643 = vld [vmem:[%s1 + $0x430] sm:$0xff]
  %v644 = vld [vmem:[%s1 + $0x438] sm:$0xff]
  %v645 = vld [vmem:[%s1 + $0x440] sm:$0xff]
  %v646 = vld [vmem:[%s1 + $0x448] sm:$0xff]
  %v647 = vld [vmem:[%s1 + $0x450] sm:$0xff]
  %v648 = vld [vmem:[%s1 + $0x458] sm:$0xff]
  %v649 = vld [vmem:[%s1 + $0x460] sm:$0xff]
  %v650 = vld [vmem:[%s1 + $0x468] sm:$0xff]
  %v651 = vld [vmem:[%s1 + $0x470] sm:$0xff]
  %v652 = vld [vmem:[%s1 + $0x478] sm:$0xff]
  %v653 = vld [vmem:[%s1 + $0x480] sm:$0xff]
  %v654 = vld [vmem:[%s1 + $0x488] sm:$0xff]
  %v655 = vld [vmem:[%s1 + $0x490] sm:$0xff]
  %v656 = vld [vmem:[%s1 + $0x498] sm:$0xff]
  %v657 = vld [vmem:[%s1 + $0x4a0] sm:$0xff]
  %v658 = vld [vmem:[%s1 + $0x4a8] sm:$0xff]
  %v659 = vld [vmem:[%s1 + $0x4b0] sm:$0xff]
  %v660 = vld [vmem:[%s1 + $0x4b8] sm:$0xff]
  %v661 = vld [vmem:[%s1 + $0x4c0] sm:$0xff]
  %v662 = vld [vmem:[%s1 + $0x4c8] sm:$0xff]
  %v663 = vld [vmem:[%s1 + $0x4d0] sm:$0xff]
  %v664 = vld [vmem:[%s1 + $0x4d8] sm:$0xff]
  %v665 = vld [vmem:[%s1 + $0x4e0] sm:$0xff]
  %v666 = vld [vmem:[%s1 + $0x4e8] sm:$0xff]
  %v667 = vld [vmem:[%s1 + $0x4f0] sm:$0xff]
  %v668 = vld [vmem:[%s1 + $0x4f8] sm:$0xff]
  %v669 = vld [vmem:[%s1 + $0x500] sm:$0xff]
  %v670 = vld [vmem:[%s1 + $0x508] sm:$0xff]
  %v671 = vld [vmem:[%s1 + $0x510] sm:$0xff]
  %v672 = vld [vmem:[%s1 + $0x518] sm:$0xff]
  %v673 = vld [vmem:[%s1 + $0x520] sm:$0xff]
  %v674 = vld [vmem:[%s1 + $0x528] sm:$0xff]
  %v675 = vld [vmem:[%s1 + $0x530] sm:$0xff]
  %v676 = vld [vmem:[%s1 + $0x538] sm:$0xff]
  %v677 = vld [vmem:[%s1 + $0x540] sm:$0xff]
  %v678 = vld [vmem:[%s1 + $0x548] sm:$0xff]
  %v679 = vld [vmem:[%s1 + $0x550] sm:$0xff]
  %v680 = vld [vmem:[%s1 + $0x558] sm:$0xff]
  %v681 = vld [vmem:[%s1 + $0x560] sm:$0xff]
  %v682 = vld [vmem:[%s1 + $0x568] sm:$0xff]
  %v683 = vld [vmem:[%s1 + $0x570] sm:$0xff]
  %v684 = vld [vmem:[%s1 + $0x578] sm:$0xff]
  %v685 = vld [vmem:[%s1 + $0x580] sm:$0xff]
  %v686 = vld [vmem:[%s1 + $0x588] sm:$0xff]
  %v687 = vld [vmem:[%s1 + $0x590] sm:$0xff]
  %v688 = vld [vmem:[%s1 + $0x598] sm:$0xff]
  %v689 = vld [vmem:[%s1 + $0x5a0] sm:$0xff]
  %v691 = vunpack.c.l.b16 %v689
  %v692 = vunpack.c.h.b16 %v689
  %v693 = vpack.c.b16 %v691, %v691
  %v694 = vpack.c.b16 %v692, %v692
  %vm695 = vcmask 64512
  %v697 = vsel %vm695, %v19, 0
  %vm699 = vcmask 1043456
  %v701 = vsel %vm699, %v693, 0
  %v704 = vsel %vm699, %v694, 0
  %706 = vmatprep.subr.bf16.mxu0 %v704
  %707 = vmatpush1.bf16.msra.mxu0 %v701
  %708 = vmatprep.subr.bf16.mxu0 0
  %709 = vmatpush1.bf16.msra.mxu0 0
  %710 = vmatprep.subr.bf16.mxu0 0
  %711 = vmatpush1.bf16.msra.mxu0 0
  %712 = vmatprep.subr.bf16.mxu0 0
  %713 = vmatpush1.bf16.msra.mxu0 0
  %714 = vmatprep.subr.bf16.mxu0 0
  %715 = vmatpush1.bf16.msra.mxu0 0
  %716 = vmatprep.subr.bf16.mxu0 0
  %717 = vmatpush1.bf16.msra.mxu0 0
  %718 = vmatprep.subr.bf16.mxu0 0
  %719 = vmatpush1.bf16.msra.mxu0 0
  %720 = vmatprep.subr.bf16.mxu0 0
  %721 = vmatpush1.bf16.msra.mxu0 0
  %722 = vmatprep.subr.bf16.mxu0 0
  %723 = vmatpush1.bf16.msra.mxu0 0
  %724 = vmatprep.subr.bf16.mxu0 0
  %725 = vmatpush1.bf16.msra.mxu0 0
  %726 = vmatprep.subr.bf16.mxu0 0
  %727 = vmatpush1.bf16.msra.mxu0 0
  %728 = vmatprep.subr.bf16.mxu0 0
  %729 = vmatpush1.bf16.msra.mxu0 0
  %730 = vmatprep.subr.bf16.mxu0 0
  %731 = vmatpush1.bf16.msra.mxu0 0
  %732 = vmatprep.subr.bf16.mxu0 0
  %733 = vmatpush1.bf16.msra.mxu0 0
  %734 = vmatprep.subr.bf16.mxu0 0
  %735 = vmatpush1.bf16.msra.mxu0 0
  %736 = vmatprep.subr.bf16.mxu0 0
  %737 = vmatpush1.bf16.msra.mxu0 0
  %738 = vmatprep.mubr.bf16.mxu0 0
  %739 = vmatmul.mubr.bf16.gmra.mrb[0].mxu0 %v697
  %v740 = vpop.f32.mrb[0].mxu0
  %v741 = vadd.f32 0.0, %v740
  %v742 = vpop.f32.mrb[0].mxu0
  %v743 = vadd.f32 0.0, %v742
  %v744 = vpop.f32.mrb[0].mxu0
  %v745 = vpop.f32.mrb[0].mxu0
  %746 = vdwg.mxu0
  %v875 = vunpack.c.l.b16 %v561
  %v876 = vunpack.c.h.b16 %v561
  %v877 = vunpack.c.l.b16 %v562
  %v878 = vunpack.c.h.b16 %v562
  %v879 = vunpack.c.l.b16 %v563
  %v880 = vunpack.c.h.b16 %v563
  %v881 = vunpack.c.l.b16 %v564
  %v882 = vunpack.c.h.b16 %v564
  %v883 = vunpack.c.l.b16 %v565
  %v884 = vunpack.c.h.b16 %v565
  %v885 = vunpack.c.l.b16 %v566
  %v886 = vunpack.c.h.b16 %v566
  %v887 = vunpack.c.l.b16 %v567
  %v888 = vunpack.c.h.b16 %v567
  %v889 = vunpack.c.l.b16 %v568
  %v890 = vunpack.c.h.b16 %v568
  %v891 = vunpack.c.l.b16 %v569
  %v892 = vunpack.c.h.b16 %v569
  %v893 = vunpack.c.l.b16 %v570
  %v894 = vunpack.c.h.b16 %v570
  %v895 = vunpack.c.l.b16 %v571
  %v896 = vunpack.c.h.b16 %v571
  %v897 = vunpack.c.l.b16 %v572
  %v898 = vunpack.c.h.b16 %v572
  %v899 = vunpack.c.l.b16 %v573
  %v900 = vunpack.c.h.b16 %v573
  %v901 = vunpack.c.l.b16 %v574
  %v902 = vunpack.c.h.b16 %v574
  %v903 = vunpack.c.l.b16 %v575
  %v904 = vunpack.c.h.b16 %v575
  %v905 = vunpack.c.l.b16 %v576
  %v906 = vunpack.c.h.b16 %v576
  %v907 = vunpack.c.l.b16 %v577
  %v908 = vunpack.c.h.b16 %v577
  %v909 = vunpack.c.l.b16 %v578
  %v910 = vunpack.c.h.b16 %v578
  %v911 = vunpack.c.l.b16 %v579
  %v912 = vunpack.c.h.b16 %v579
  %v913 = vunpack.c.l.b16 %v580
  %v914 = vunpack.c.h.b16 %v580
  %v915 = vunpack.c.l.b16 %v581
  %v916 = vunpack.c.h.b16 %v581
  %v917 = vunpack.c.l.b16 %v582
  %v918 = vunpack.c.h.b16 %v582
  %v919 = vunpack.c.l.b16 %v583
  %v920 = vunpack.c.h.b16 %v583
  %v921 = vunpack.c.l.b16 %v584
  %v922 = vunpack.c.h.b16 %v584
  %v923 = vunpack.c.l.b16 %v585
  %v924 = vunpack.c.h.b16 %v585
  %v925 = vunpack.c.l.b16 %v586
  %v926 = vunpack.c.h.b16 %v586
  %v927 = vunpack.c.l.b16 %v587
  %v928 = vunpack.c.h.b16 %v587
  %v929 = vunpack.c.l.b16 %v588
  %v930 = vunpack.c.h.b16 %v588
  %v931 = vunpack.c.l.b16 %v589
  %v932 = vunpack.c.h.b16 %v589
  %v933 = vunpack.c.l.b16 %v590
  %v934 = vunpack.c.h.b16 %v590
  %v935 = vunpack.c.l.b16 %v591
  %v936 = vunpack.c.h.b16 %v591
  %v937 = vunpack.c.l.b16 %v592
  %v938 = vunpack.c.h.b16 %v592
  %v939 = vunpack.c.l.b16 %v593
  %v940 = vunpack.c.h.b16 %v593
  %v941 = vunpack.c.l.b16 %v594
  %v942 = vunpack.c.h.b16 %v594
  %v943 = vunpack.c.l.b16 %v595
  %v944 = vunpack.c.h.b16 %v595
  %v945 = vunpack.c.l.b16 %v596
  %v946 = vunpack.c.h.b16 %v596
  %v947 = vunpack.c.l.b16 %v597
  %v948 = vunpack.c.h.b16 %v597
  %v949 = vunpack.c.l.b16 %v598
  %v950 = vunpack.c.h.b16 %v598
  %v951 = vunpack.c.l.b16 %v599
  %v952 = vunpack.c.h.b16 %v599
  %v953 = vunpack.c.l.b16 %v600
  %v954 = vunpack.c.h.b16 %v600
  %v955 = vunpack.c.l.b16 %v601
  %v956 = vunpack.c.h.b16 %v601
  %v957 = vunpack.c.l.b16 %v602
  %v958 = vunpack.c.h.b16 %v602
  %v959 = vunpack.c.l.b16 %v603
  %v960 = vunpack.c.h.b16 %v603
  %v961 = vunpack.c.l.b16 %v604
  %v962 = vunpack.c.h.b16 %v604
  %v963 = vunpack.c.l.b16 %v605
  %v964 = vunpack.c.h.b16 %v605
  %v965 = vunpack.c.l.b16 %v606
  %v966 = vunpack.c.h.b16 %v606
  %v967 = vunpack.c.l.b16 %v607
  %v968 = vunpack.c.h.b16 %v607
  %v969 = vunpack.c.l.b16 %v608
  %v970 = vunpack.c.h.b16 %v608
  %v971 = vunpack.c.l.b16 %v609
  %v972 = vunpack.c.h.b16 %v609
  %v973 = vunpack.c.l.b16 %v610
  %v974 = vunpack.c.h.b16 %v610
  %v975 = vunpack.c.l.b16 %v611
  %v976 = vunpack.c.h.b16 %v611
  %v977 = vunpack.c.l.b16 %v612
  %v978 = vunpack.c.h.b16 %v612
  %v979 = vunpack.c.l.b16 %v613
  %v980 = vunpack.c.h.b16 %v613
  %v981 = vunpack.c.l.b16 %v614
  %v982 = vunpack.c.h.b16 %v614
  %v983 = vunpack.c.l.b16 %v615
  %v984 = vunpack.c.h.b16 %v615
  %v985 = vunpack.c.l.b16 %v616
  %v986 = vunpack.c.h.b16 %v616
  %v987 = vunpack.c.l.b16 %v617
  %v988 = vunpack.c.h.b16 %v617
  %v989 = vunpack.c.l.b16 %v618
  %v990 = vunpack.c.h.b16 %v618
  %v991 = vunpack.c.l.b16 %v619
  %v992 = vunpack.c.h.b16 %v619
  %v993 = vunpack.c.l.b16 %v620
  %v994 = vunpack.c.h.b16 %v620
  %v995 = vunpack.c.l.b16 %v621
  %v996 = vunpack.c.h.b16 %v621
  %v997 = vunpack.c.l.b16 %v622
  %v998 = vunpack.c.h.b16 %v622
  %v999 = vunpack.c.l.b16 %v623
  %v1000 = vunpack.c.h.b16 %v623
  %v1001 = vunpack.c.l.b16 %v624
  %v1002 = vunpack.c.h.b16 %v624
  %v1003 = vunpack.c.l.b16 %v625
  %v1004 = vunpack.c.h.b16 %v625
  %v1005 = vunpack.c.l.b16 %v626
  %v1006 = vunpack.c.h.b16 %v626
  %v1007 = vunpack.c.l.b16 %v627
  %v1008 = vunpack.c.h.b16 %v627
  %v1009 = vunpack.c.l.b16 %v628
  %v1010 = vunpack.c.h.b16 %v628
  %v1011 = vunpack.c.l.b16 %v629
  %v1012 = vunpack.c.h.b16 %v629
  %v1013 = vunpack.c.l.b16 %v630
  %v1014 = vunpack.c.h.b16 %v630
  %v1015 = vunpack.c.l.b16 %v631
  %v1016 = vunpack.c.h.b16 %v631
  %v1017 = vunpack.c.l.b16 %v632
  %v1018 = vunpack.c.h.b16 %v632
  %v1019 = vunpack.c.l.b16 %v633
  %v1020 = vunpack.c.h.b16 %v633
  %v1021 = vunpack.c.l.b16 %v634
  %v1022 = vunpack.c.h.b16 %v634
  %v1023 = vunpack.c.l.b16 %v635
  %v1024 = vunpack.c.h.b16 %v635
  %v1025 = vunpack.c.l.b16 %v636
  %v1026 = vunpack.c.h.b16 %v636
  %v1027 = vunpack.c.l.b16 %v637
  %v1028 = vunpack.c.h.b16 %v637
  %v1029 = vunpack.c.l.b16 %v638
  %v1030 = vunpack.c.h.b16 %v638
  %v1031 = vunpack.c.l.b16 %v639
  %v1032 = vunpack.c.h.b16 %v639
  %v1033 = vunpack.c.l.b16 %v640
  %v1034 = vunpack.c.h.b16 %v640
  %v1035 = vunpack.c.l.b16 %v641
  %v1036 = vunpack.c.h.b16 %v641
  %v1037 = vunpack.c.l.b16 %v642
  %v1038 = vunpack.c.h.b16 %v642
  %v1039 = vunpack.c.l.b16 %v643
  %v1040 = vunpack.c.h.b16 %v643
  %v1041 = vunpack.c.l.b16 %v644
  %v1042 = vunpack.c.h.b16 %v644
  %v1043 = vunpack.c.l.b16 %v645
  %v1044 = vunpack.c.h.b16 %v645
  %v1045 = vunpack.c.l.b16 %v646
  %v1046 = vunpack.c.h.b16 %v646
  %v1047 = vunpack.c.l.b16 %v647
  %v1048 = vunpack.c.h.b16 %v647
  %v1049 = vunpack.c.l.b16 %v648
  %v1050 = vunpack.c.h.b16 %v648
  %v1051 = vunpack.c.l.b16 %v649
  %v1052 = vunpack.c.h.b16 %v649
  %v1053 = vunpack.c.l.b16 %v650
  %v1054 = vunpack.c.h.b16 %v650
  %v1055 = vunpack.c.l.b16 %v651
  %v1056 = vunpack.c.h.b16 %v651
  %v1057 = vunpack.c.l.b16 %v652
  %v1058 = vunpack.c.h.b16 %v652
  %v1059 = vunpack.c.l.b16 %v653
  %v1060 = vunpack.c.h.b16 %v653
  %v1061 = vunpack.c.l.b16 %v654
  %v1062 = vunpack.c.h.b16 %v654
  %v1063 = vunpack.c.l.b16 %v655
  %v1064 = vunpack.c.h.b16 %v655
  %v1065 = vunpack.c.l.b16 %v656
  %v1066 = vunpack.c.h.b16 %v656
  %v1067 = vunpack.c.l.b16 %v657
  %v1068 = vunpack.c.h.b16 %v657
  %v1069 = vunpack.c.l.b16 %v658
  %v1070 = vunpack.c.h.b16 %v658
  %v1071 = vunpack.c.l.b16 %v659
  %v1072 = vunpack.c.h.b16 %v659
  %v1073 = vunpack.c.l.b16 %v660
  %v1074 = vunpack.c.h.b16 %v660
  %v1075 = vunpack.c.l.b16 %v661
  %v1076 = vunpack.c.h.b16 %v661
  %v1077 = vunpack.c.l.b16 %v662
  %v1078 = vunpack.c.h.b16 %v662
  %v1079 = vunpack.c.l.b16 %v663
  %v1080 = vunpack.c.h.b16 %v663
  %v1081 = vunpack.c.l.b16 %v664
  %v1082 = vunpack.c.h.b16 %v664
  %v1083 = vunpack.c.l.b16 %v665
  %v1084 = vunpack.c.h.b16 %v665
  %v1085 = vunpack.c.l.b16 %v666
  %v1086 = vunpack.c.h.b16 %v666
  %v1087 = vunpack.c.l.b16 %v667
  %v1088 = vunpack.c.h.b16 %v667
  %v1089 = vunpack.c.l.b16 %v668
  %v1090 = vunpack.c.h.b16 %v668
  %v1091 = vunpack.c.l.b16 %v669
  %v1092 = vunpack.c.h.b16 %v669
  %v1093 = vunpack.c.l.b16 %v670
  %v1094 = vunpack.c.h.b16 %v670
  %v1095 = vunpack.c.l.b16 %v671
  %v1096 = vunpack.c.h.b16 %v671
  %v1097 = vunpack.c.l.b16 %v672
  %v1098 = vunpack.c.h.b16 %v672
  %v1099 = vunpack.c.l.b16 %v673
  %v1100 = vunpack.c.h.b16 %v673
  %v1101 = vunpack.c.l.b16 %v674
  %v1102 = vunpack.c.h.b16 %v674
  %v1103 = vunpack.c.l.b16 %v675
  %v1104 = vunpack.c.h.b16 %v675
  %v1105 = vunpack.c.l.b16 %v676
  %v1106 = vunpack.c.h.b16 %v676
  %v1107 = vunpack.c.l.b16 %v677
  %v1108 = vunpack.c.h.b16 %v677
  %v1109 = vunpack.c.l.b16 %v678
  %v1110 = vunpack.c.h.b16 %v678
  %v1111 = vunpack.c.l.b16 %v679
  %v1112 = vunpack.c.h.b16 %v679
  %v1113 = vunpack.c.l.b16 %v680
  %v1114 = vunpack.c.h.b16 %v680
  %v1115 = vunpack.c.l.b16 %v681
  %v1116 = vunpack.c.h.b16 %v681
  %v1117 = vunpack.c.l.b16 %v682
  %v1118 = vunpack.c.h.b16 %v682
  %v1119 = vunpack.c.l.b16 %v683
  %v1120 = vunpack.c.h.b16 %v683
  %v1121 = vunpack.c.l.b16 %v684
  %v1122 = vunpack.c.h.b16 %v684
  %v1123 = vunpack.c.l.b16 %v685
  %v1124 = vunpack.c.h.b16 %v685
  %v1125 = vunpack.c.l.b16 %v686
  %v1126 = vunpack.c.h.b16 %v686
  %v1127 = vunpack.c.l.b16 %v687
  %v1128 = vunpack.c.h.b16 %v687
  %v1129 = vunpack.c.l.b16 %v688
  %v1130 = vunpack.c.h.b16 %v688
  %v1131 = vpack.c.b16 %v877, %v875
  %v1132 = vpack.c.b16 %v878, %v876
  %v1133 = vpack.c.b16 %v881, %v879
  %v1134 = vpack.c.b16 %v882, %v880
  %v1135 = vpack.c.b16 %v885, %v883
  %v1136 = vpack.c.b16 %v886, %v884
  %v1137 = vpack.c.b16 %v889, %v887
  %v1138 = vpack.c.b16 %v890, %v888
  %v1139 = vpack.c.b16 %v893, %v891
  %v1140 = vpack.c.b16 %v894, %v892
  %v1141 = vpack.c.b16 %v897, %v895
  %v1142 = vpack.c.b16 %v898, %v896
  %v1143 = vpack.c.b16 %v901, %v899
  %v1144 = vpack.c.b16 %v902, %v900
  %v1145 = vpack.c.b16 %v905, %v903
  %v1146 = vpack.c.b16 %v906, %v904
  %v1147 = vpack.c.b16 %v909, %v907
  %v1148 = vpack.c.b16 %v910, %v908
  %v1149 = vpack.c.b16 %v913, %v911
  %v1150 = vpack.c.b16 %v914, %v912
  %v1151 = vpack.c.b16 %v917, %v915
  %v1152 = vpack.c.b16 %v918, %v916
  %v1153 = vpack.c.b16 %v921, %v919
  %v1154 = vpack.c.b16 %v922, %v920
  %v1155 = vpack.c.b16 %v925, %v923
  %v1156 = vpack.c.b16 %v926, %v924
  %v1157 = vpack.c.b16 %v929, %v927
  %v1158 = vpack.c.b16 %v930, %v928
  %v1159 = vpack.c.b16 %v933, %v931
  %v1160 = vpack.c.b16 %v934, %v932
  %v1161 = vpack.c.b16 %v937, %v935
  %v1162 = vpack.c.b16 %v938, %v936
  %v1163 = vpack.c.b16 %v941, %v939
  %v1164 = vpack.c.b16 %v942, %v940
  %v1165 = vpack.c.b16 %v945, %v943
  %v1166 = vpack.c.b16 %v946, %v944
  %v1167 = vpack.c.b16 %v949, %v947
  %v1168 = vpack.c.b16 %v950, %v948
  %v1169 = vpack.c.b16 %v953, %v951
  %v1170 = vpack.c.b16 %v954, %v952
  %v1171 = vpack.c.b16 %v957, %v955
  %v1172 = vpack.c.b16 %v958, %v956
  %v1173 = vpack.c.b16 %v961, %v959
  %v1174 = vpack.c.b16 %v962, %v960
  %v1175 = vpack.c.b16 %v965, %v963
  %v1176 = vpack.c.b16 %v966, %v964
  %v1177 = vpack.c.b16 %v969, %v967
  %v1178 = vpack.c.b16 %v970, %v968
  %v1179 = vpack.c.b16 %v973, %v971
  %v1180 = vpack.c.b16 %v974, %v972
  %v1181 = vpack.c.b16 %v977, %v975
  %v1182 = vpack.c.b16 %v978, %v976
  %v1183 = vpack.c.b16 %v981, %v979
  %v1184 = vpack.c.b16 %v982, %v980
  %v1185 = vpack.c.b16 %v985, %v983
  %v1186 = vpack.c.b16 %v986, %v984
  %v1187 = vpack.c.b16 %v989, %v987
  %v1188 = vpack.c.b16 %v990, %v988
  %v1189 = vpack.c.b16 %v993, %v991
  %v1190 = vpack.c.b16 %v994, %v992
  %v1191 = vpack.c.b16 %v997, %v995
  %v1192 = vpack.c.b16 %v998, %v996
  %v1193 = vpack.c.b16 %v1001, %v999
  %v1194 = vpack.c.b16 %v1002, %v1000
  %v1195 = vpack.c.b16 %v1005, %v1003
  %v1196 = vpack.c.b16 %v1006, %v1004
  %v1197 = vpack.c.b16 %v1009, %v1007
  %v1198 = vpack.c.b16 %v1010, %v1008
  %v1199 = vpack.c.b16 %v1013, %v1011
  %v1200 = vpack.c.b16 %v1014, %v1012
  %v1201 = vpack.c.b16 %v1017, %v1015
  %v1202 = vpack.c.b16 %v1018, %v1016
  %v1203 = vpack.c.b16 %v1021, %v1019
  %v1204 = vpack.c.b16 %v1022, %v1020
  %v1205 = vpack.c.b16 %v1025, %v1023
  %v1206 = vpack.c.b16 %v1026, %v1024
  %v1207 = vpack.c.b16 %v1029, %v1027
  %v1208 = vpack.c.b16 %v1030, %v1028
  %v1209 = vpack.c.b16 %v1033, %v1031
  %v1210 = vpack.c.b16 %v1034, %v1032
  %v1211 = vpack.c.b16 %v1037, %v1035
  %v1212 = vpack.c.b16 %v1038, %v1036
  %v1213 = vpack.c.b16 %v1041, %v1039
  %v1214 = vpack.c.b16 %v1042, %v1040
  %v1215 = vpack.c.b16 %v1045, %v1043
  %v1216 = vpack.c.b16 %v1046, %v1044
  %v1217 = vpack.c.b16 %v1049, %v1047
  %v1218 = vpack.c.b16 %v1050, %v1048
  %v1219 = vpack.c.b16 %v1053, %v1051
  %v1220 = vpack.c.b16 %v1054, %v1052
  %v1221 = vpack.c.b16 %v1057, %v1055
  %v1222 = vpack.c.b16 %v1058, %v1056
  %v1223 = vpack.c.b16 %v1061, %v1059
  %v1224 = vpack.c.b16 %v1062, %v1060
  %v1225 = vpack.c.b16 %v1065, %v1063
  %v1226 = vpack.c.b16 %v1066, %v1064
  %v1227 = vpack.c.b16 %v1069, %v1067
  %v1228 = vpack.c.b16 %v1070, %v1068
  %v1229 = vpack.c.b16 %v1073, %v1071
  %v1230 = vpack.c.b16 %v1074, %v1072
  %v1231 = vpack.c.b16 %v1077, %v1075
  %v1232 = vpack.c.b16 %v1078, %v1076
  %v1233 = vpack.c.b16 %v1081, %v1079
  %v1234 = vpack.c.b16 %v1082, %v1080
  %v1235 = vpack.c.b16 %v1085, %v1083
  %v1236 = vpack.c.b16 %v1086, %v1084
  %v1237 = vpack.c.b16 %v1089, %v1087
  %v1238 = vpack.c.b16 %v1090, %v1088
  %v1239 = vpack.c.b16 %v1093, %v1091
  %v1240 = vpack.c.b16 %v1094, %v1092
  %v1241 = vpack.c.b16 %v1097, %v1095
  %v1242 = vpack.c.b16 %v1098, %v1096
  %v1243 = vpack.c.b16 %v1101, %v1099
  %v1244 = vpack.c.b16 %v1102, %v1100
  %v1245 = vpack.c.b16 %v1105, %v1103
  %v1246 = vpack.c.b16 %v1106, %v1104
  %v1247 = vpack.c.b16 %v1109, %v1107
  %v1248 = vpack.c.b16 %v1110, %v1108
  %v1249 = vpack.c.b16 %v1113, %v1111
  %v1250 = vpack.c.b16 %v1114, %v1112
  %v1251 = vpack.c.b16 %v1117, %v1115
  %v1252 = vpack.c.b16 %v1118, %v1116
  %v1253 = vpack.c.b16 %v1121, %v1119
  %v1254 = vpack.c.b16 %v1122, %v1120
  %v1255 = vpack.c.b16 %v1125, %v1123
  %v1256 = vpack.c.b16 %v1126, %v1124
  %v1257 = vpack.c.b16 %v1129, %v1127
  %v1258 = vpack.c.b16 %v1130, %v1128
  %1387 = vmatprep.subr.bf16.mxu0 %v1132
  %1388 = vmatpush1.bf16.msra.mxu0 %v1131
  %1389 = vmatprep.subr.bf16.mxu0 %v1134
  %1390 = vmatpush1.bf16.msra.mxu0 %v1133
  %1391 = vmatprep.subr.bf16.mxu0 %v1136
  %1392 = vmatpush1.bf16.msra.mxu0 %v1135
  %1393 = vmatprep.subr.bf16.mxu0 %v1138
  %1394 = vmatpush1.bf16.msra.mxu0 %v1137
  %1395 = vmatprep.subr.bf16.mxu0 %v1140
  %1396 = vmatpush1.bf16.msra.mxu0 %v1139
  %1397 = vmatprep.subr.bf16.mxu0 %v1142
  %1398 = vmatpush1.bf16.msra.mxu0 %v1141
  %1399 = vmatprep.subr.bf16.mxu0 %v1144
  %1400 = vmatpush1.bf16.msra.mxu0 %v1143
  %1401 = vmatprep.subr.bf16.mxu0 %v1146
  %1402 = vmatpush1.bf16.msra.mxu0 %v1145
  %1403 = vmatprep.subr.bf16.mxu0 %v1148
  %1404 = vmatpush1.bf16.msra.mxu0 %v1147
  %1405 = vmatprep.subr.bf16.mxu0 %v1150
  %1406 = vmatpush1.bf16.msra.mxu0 %v1149
  %1407 = vmatprep.subr.bf16.mxu0 %v1152
  %1408 = vmatpush1.bf16.msra.mxu0 %v1151
  %1409 = vmatprep.subr.bf16.mxu0 %v1154
  %1410 = vmatpush1.bf16.msra.mxu0 %v1153
  %1411 = vmatprep.subr.bf16.mxu0 %v1156
  %1412 = vmatpush1.bf16.msra.mxu0 %v1155
  %1413 = vmatprep.subr.bf16.mxu0 %v1158
  %1414 = vmatpush1.bf16.msra.mxu0 %v1157
  %1415 = vmatprep.subr.bf16.mxu0 %v1160
  %1416 = vmatpush1.bf16.msra.mxu0 %v1159
  %1417 = vmatprep.subr.bf16.mxu0 %v1162
  %1418 = vmatpush1.bf16.msra.mxu0 %v1161
  %1419 = vmatprep.mubr.bf16.mxu0 %v535
  %1420 = vmatmul.mubr.bf16.gmra.mrb[0].mxu0 %v531
  %v1421 = vpop.f32.mrb[0].mxu0
  %v1422 = vadd.f32 %v741, %v1421
  %v1423 = vpop.f32.mrb[0].mxu0
  %v1424 = vadd.f32 %v743, %v1423
  %v1425 = vpop.f32.mrb[0].mxu0
  %v1426 = vpop.f32.mrb[0].mxu0
  %1427 = vdwg.mxu0
  %1428 = vmatprep.subr.bf16.mxu0 %v1164
  %1429 = vmatpush1.bf16.msra.mxu0 %v1163
  %1430 = vmatprep.subr.bf16.mxu0 %v1166
  %1431 = vmatpush1.bf16.msra.mxu0 %v1165
  %1432 = vmatprep.subr.bf16.mxu0 %v1168
  %1433 = vmatpush1.bf16.msra.mxu0 %v1167
  %1434 = vmatprep.subr.bf16.mxu0 %v1170
  %1435 = vmatpush1.bf16.msra.mxu0 %v1169
  %1436 = vmatprep.subr.bf16.mxu0 %v1172
  %1437 = vmatpush1.bf16.msra.mxu0 %v1171
  %1438 = vmatprep.subr.bf16.mxu0 %v1174
  %1439 = vmatpush1.bf16.msra.mxu0 %v1173
  %1440 = vmatprep.subr.bf16.mxu0 %v1176
  %1441 = vmatpush1.bf16.msra.mxu0 %v1175
  %1442 = vmatprep.subr.bf16.mxu0 %v1178
  %1443 = vmatpush1.bf16.msra.mxu0 %v1177
  %1444 = vmatprep.subr.bf16.mxu0 %v1180
  %1445 = vmatpush1.bf16.msra.mxu0 %v1179
  %1446 = vmatprep.subr.bf16.mxu0 %v1182
  %1447 = vmatpush1.bf16.msra.mxu0 %v1181
  %1448 = vmatprep.subr.bf16.mxu0 %v1184
  %1449 = vmatpush1.bf16.msra.mxu0 %v1183
  %1450 = vmatprep.subr.bf16.mxu0 %v1186
  %1451 = vmatpush1.bf16.msra.mxu0 %v1185
  %1452 = vmatprep.subr.bf16.mxu0 %v1188
  %1453 = vmatpush1.bf16.msra.mxu0 %v1187
  %1454 = vmatprep.subr.bf16.mxu0 %v1190
  %1455 = vmatpush1.bf16.msra.mxu0 %v1189
  %1456 = vmatprep.subr.bf16.mxu0 %v1192
  %1457 = vmatpush1.bf16.msra.mxu0 %v1191
  %1458 = vmatprep.subr.bf16.mxu0 %v1194
  %1459 = vmatpush1.bf16.msra.mxu0 %v1193
  %1460 = vmatprep.mubr.bf16.mxu0 %v543
  %1461 = vmatmul.mubr.bf16.gmra.mrb[0].mxu0 %v539
  %v1462 = vpop.f32.mrb[0].mxu0
  %v1463 = vadd.f32 %v1422, %v1462
  %v1464 = vpop.f32.mrb[0].mxu0
  %v1465 = vadd.f32 %v1424, %v1464
  %v1466 = vpop.f32.mrb[0].mxu0
  %v1467 = vpop.f32.mrb[0].mxu0
  %1468 = vdwg.mxu0
  %1469 = vmatprep.subr.bf16.mxu0 %v1196
  %1470 = vmatpush1.bf16.msra.mxu0 %v1195
  %1471 = vmatprep.subr.bf16.mxu0 %v1198
  %1472 = vmatpush1.bf16.msra.mxu0 %v1197
  %1473 = vmatprep.subr.bf16.mxu0 %v1200
  %1474 = vmatpush1.bf16.msra.mxu0 %v1199
  %1475 = vmatprep.subr.bf16.mxu0 %v1202
  %1476 = vmatpush1.bf16.msra.mxu0 %v1201
  %1477 = vmatprep.subr.bf16.mxu0 %v1204
  %1478 = vmatpush1.bf16.msra.mxu0 %v1203
  %1479 = vmatprep.subr.bf16.mxu0 %v1206
  %1480 = vmatpush1.bf16.msra.mxu0 %v1205
  %1481 = vmatprep.subr.bf16.mxu0 %v1208
  %1482 = vmatpush1.bf16.msra.mxu0 %v1207
  %1483 = vmatprep.subr.bf16.mxu0 %v1210
  %1484 = vmatpush1.bf16.msra.mxu0 %v1209
  %1485 = vmatprep.subr.bf16.mxu0 %v1212
  %1486 = vmatpush1.bf16.msra.mxu0 %v1211
  %1487 = vmatprep.subr.bf16.mxu0 %v1214
  %1488 = vmatpush1.bf16.msra.mxu0 %v1213
  %1489 = vmatprep.subr.bf16.mxu0 %v1216
  %1490 = vmatpush1.bf16.msra.mxu0 %v1215
  %1491 = vmatprep.subr.bf16.mxu0 %v1218
  %1492 = vmatpush1.bf16.msra.mxu0 %v1217
  %1493 = vmatprep.subr.bf16.mxu0 %v1220
  %1494 = vmatpush1.bf16.msra.mxu0 %v1219
  %1495 = vmatprep.subr.bf16.mxu0 %v1222
  %1496 = vmatpush1.bf16.msra.mxu0 %v1221
  %1497 = vmatprep.subr.bf16.mxu0 %v1224
  %1498 = vmatpush1.bf16.msra.mxu0 %v1223
  %1499 = vmatprep.subr.bf16.mxu0 %v1226
  %1500 = vmatpush1.bf16.msra.mxu0 %v1225
  %1501 = vmatprep.mubr.bf16.mxu0 %v551
  %1502 = vmatmul.mubr.bf16.gmra.mrb[0].mxu0 %v547
  %v1503 = vpop.f32.mrb[0].mxu0
  %v1504 = vadd.f32 %v1463, %v1503
  %v1505 = vpop.f32.mrb[0].mxu0
  %v1506 = vadd.f32 %v1465, %v1505
  %v1507 = vpop.f32.mrb[0].mxu0
  %v1508 = vpop.f32.mrb[0].mxu0
  %1509 = vdwg.mxu0
  %1510 = vmatprep.subr.bf16.mxu0 %v1228
  %1511 = vmatpush1.bf16.msra.mxu0 %v1227
  %1512 = vmatprep.subr.bf16.mxu0 %v1230
  %1513 = vmatpush1.bf16.msra.mxu0 %v1229
  %1514 = vmatprep.subr.bf16.mxu0 %v1232
  %1515 = vmatpush1.bf16.msra.mxu0 %v1231
  %1516 = vmatprep.subr.bf16.mxu0 %v1234
  %1517 = vmatpush1.bf16.msra.mxu0 %v1233
  %1518 = vmatprep.subr.bf16.mxu0 %v1236
  %1519 = vmatpush1.bf16.msra.mxu0 %v1235
  %1520 = vmatprep.subr.bf16.mxu0 %v1238
  %1521 = vmatpush1.bf16.msra.mxu0 %v1237
  %1522 = vmatprep.subr.bf16.mxu0 %v1240
  %1523 = vmatpush1.bf16.msra.mxu0 %v1239
  %1524 = vmatprep.subr.bf16.mxu0 %v1242
  %1525 = vmatpush1.bf16.msra.mxu0 %v1241
  %1526 = vmatprep.subr.bf16.mxu0 %v1244
  %1527 = vmatpush1.bf16.msra.mxu0 %v1243
  %1528 = vmatprep.subr.bf16.mxu0 %v1246
  %1529 = vmatpush1.bf16.msra.mxu0 %v1245
  %1530 = vmatprep.subr.bf16.mxu0 %v1248
  %1531 = vmatpush1.bf16.msra.mxu0 %v1247
  %1532 = vmatprep.subr.bf16.mxu0 %v1250
  %1533 = vmatpush1.bf16.msra.mxu0 %v1249
  %1534 = vmatprep.subr.bf16.mxu0 %v1252
  %1535 = vmatpush1.bf16.msra.mxu0 %v1251
  %1536 = vmatprep.subr.bf16.mxu0 %v1254
  %1537 = vmatpush1.bf16.msra.mxu0 %v1253
  %1538 = vmatprep.subr.bf16.mxu0 %v1256
  %1539 = vmatpush1.bf16.msra.mxu0 %v1255
  %1540 = vmatprep.subr.bf16.mxu0 %v1258
  %1541 = vmatpush1.bf16.msra.mxu0 %v1257
  %1542 = vmatprep.mubr.bf16.mxu0 %v559
  %1543 = vmatmul.mubr.bf16.gmra.mrb[0].mxu0 %v555
  %v1544 = vpop.f32.mrb[0].mxu0
  %v1545 = vadd.f32 %v1504, %v1544
  %v1546 = vpop.f32.mrb[0].mxu0
  %v1547 = vadd.f32 %v1506, %v1546
  %v1548 = vpop.f32.mrb[0].mxu0
  %v1549 = vpop.f32.mrb[0].mxu0
  %1550 = vdwg.mxu0
  %v1551 = vld [vmem:[%s2 + $0x4] sm:$0x3]
  %v1553 = vlaneseq
  %v1554 = vshrl.u32 %v1553, 7
  %v1555 = vsub.s32 0, %v1554
  %v1556 = vrot.slane %v1551, %v1555
  %v1557 = vlaneseq
  %v1558 = vshrl.u32 %v1557, 7
  %v1559 = vsub.s32 1, %v1558
  %v1560 = vrot.slane %v1551, %v1559
  %v1563 = vadd.f32 %v1545, %v1556
  %v1564 = vadd.f32 %v1547, %v1560
  %v1565 = vmax.f32 %v1563, 0.0
  %v1566 = vmax.f32 %v1564, 0.0
  %v1567 = vpack.c.bf16 %v1565, %v1565
  %v1568 = vpack.c.bf16 %v1566, %v1566
  %v1569 = vld [vmem:[%s1 + $0x5b0] sm:$0xff]
  %v1570 = vld [vmem:[%s1 + $0x5b8] sm:$0xff]
  %v1571 = vld [vmem:[%s1 + $0x5c0] sm:$0xff]
  %v1572 = vld [vmem:[%s1 + $0x5c8] sm:$0xff]
  %v1573 = vld [vmem:[%s1 + $0x5d0] sm:$0xff]
  %v1574 = vld [vmem:[%s1 + $0x5d8] sm:$0xff]
  %v1575 = vld [vmem:[%s1 + $0x5e0] sm:$0xff]
  %v1576 = vld [vmem:[%s1 + $0x5e8] sm:$0xff]
  %v1577 = vld [vmem:[%s1 + $0x5f0] sm:$0xff]
  %v1578 = vld [vmem:[%s1 + $0x5f8] sm:$0xff]
  %v1579 = vld [vmem:[%s1 + $0x600] sm:$0xff]
  %v1580 = vld [vmem:[%s1 + $0x608] sm:$0xff]
  %v1581 = vld [vmem:[%s1 + $0x610] sm:$0xff]
  %v1582 = vld [vmem:[%s1 + $0x618] sm:$0xff]
  %v1583 = vld [vmem:[%s1 + $0x620] sm:$0xff]
  %v1584 = vld [vmem:[%s1 + $0x628] sm:$0xff]
  %v1585 = vld [vmem:[%s1 + $0x630] sm:$0xff]
  %v1586 = vld [vmem:[%s1 + $0x638] sm:$0xff]
  %v1587 = vld [vmem:[%s1 + $0x640] sm:$0xff]
  %v1588 = vld [vmem:[%s1 + $0x648] sm:$0xff]
  %v1589 = vld [vmem:[%s1 + $0x650] sm:$0xff]
  %v1590 = vld [vmem:[%s1 + $0x658] sm:$0xff]
  %v1591 = vld [vmem:[%s1 + $0x660] sm:$0xff]
  %v1592 = vld [vmem:[%s1 + $0x668] sm:$0xff]
  %v1593 = vld [vmem:[%s1 + $0x670] sm:$0xff]
  %v1594 = vld [vmem:[%s1 + $0x678] sm:$0xff]
  %v1595 = vld [vmem:[%s1 + $0x680] sm:$0xff]
  %v1596 = vld [vmem:[%s1 + $0x688] sm:$0xff]
  %v1597 = vld [vmem:[%s1 + $0x690] sm:$0xff]
  %v1598 = vld [vmem:[%s1 + $0x698] sm:$0xff]
  %v1599 = vld [vmem:[%s1 + $0x6a0] sm:$0xff]
  %v1600 = vld [vmem:[%s1 + $0x6a8] sm:$0xff]
  %v1601 = vld [vmem:[%s2 + $0x6] sm:$0x3]
  %v1603 = vlaneseq
  %v1604 = vshrl.u32 %v1603, 7
  %v1605 = vsub.s32 0, %v1604
  %v1606 = vrot.slane %v1601, %v1605
  %v1607 = vlaneseq
  %v1608 = vshrl.u32 %v1607, 7
  %v1609 = vsub.s32 1, %v1608
  %v1610 = vrot.slane %v1601, %v1609
  %v1645 = vunpack.c.l.b16 %v1569
  %v1646 = vunpack.c.h.b16 %v1569
  %v1647 = vunpack.c.l.b16 %v1570
  %v1648 = vunpack.c.h.b16 %v1570
  %v1649 = vunpack.c.l.b16 %v1571
  %v1650 = vunpack.c.h.b16 %v1571
  %v1651 = vunpack.c.l.b16 %v1572
  %v1652 = vunpack.c.h.b16 %v1572
  %v1653 = vunpack.c.l.b16 %v1573
  %v1654 = vunpack.c.h.b16 %v1573
  %v1655 = vunpack.c.l.b16 %v1574
  %v1656 = vunpack.c.h.b16 %v1574
  %v1657 = vunpack.c.l.b16 %v1575
  %v1658 = vunpack.c.h.b16 %v1575
  %v1659 = vunpack.c.l.b16 %v1576
  %v1660 = vunpack.c.h.b16 %v1576
  %v1661 = vunpack.c.l.b16 %v1577
  %v1662 = vunpack.c.h.b16 %v1577
  %v1663 = vunpack.c.l.b16 %v1578
  %v1664 = vunpack.c.h.b16 %v1578
  %v1665 = vunpack.c.l.b16 %v1579
  %v1666 = vunpack.c.h.b16 %v1579
  %v1667 = vunpack.c.l.b16 %v1580
  %v1668 = vunpack.c.h.b16 %v1580
  %v1669 = vunpack.c.l.b16 %v1581
  %v1670 = vunpack.c.h.b16 %v1581
  %v1671 = vunpack.c.l.b16 %v1582
  %v1672 = vunpack.c.h.b16 %v1582
  %v1673 = vunpack.c.l.b16 %v1583
  %v1674 = vunpack.c.h.b16 %v1583
  %v1675 = vunpack.c.l.b16 %v1584
  %v1676 = vunpack.c.h.b16 %v1584
  %v1677 = vunpack.c.l.b16 %v1585
  %v1678 = vunpack.c.h.b16 %v1585
  %v1679 = vunpack.c.l.b16 %v1586
  %v1680 = vunpack.c.h.b16 %v1586
  %v1681 = vunpack.c.l.b16 %v1587
  %v1682 = vunpack.c.h.b16 %v1587
  %v1683 = vunpack.c.l.b16 %v1588
  %v1684 = vunpack.c.h.b16 %v1588
  %v1685 = vunpack.c.l.b16 %v1589
  %v1686 = vunpack.c.h.b16 %v1589
  %v1687 = vunpack.c.l.b16 %v1590
  %v1688 = vunpack.c.h.b16 %v1590
  %v1689 = vunpack.c.l.b16 %v1591
  %v1690 = vunpack.c.h.b16 %v1591
  %v1691 = vunpack.c.l.b16 %v1592
  %v1692 = vunpack.c.h.b16 %v1592
  %v1693 = vunpack.c.l.b16 %v1593
  %v1694 = vunpack.c.h.b16 %v1593
  %v1695 = vunpack.c.l.b16 %v1594
  %v1696 = vunpack.c.h.b16 %v1594
  %v1697 = vunpack.c.l.b16 %v1595
  %v1698 = vunpack.c.h.b16 %v1595
  %v1699 = vunpack.c.l.b16 %v1596
  %v1700 = vunpack.c.h.b16 %v1596
  %v1701 = vunpack.c.l.b16 %v1597
  %v1702 = vunpack.c.h.b16 %v1597
  %v1703 = vunpack.c.l.b16 %v1598
  %v1704 = vunpack.c.h.b16 %v1598
  %v1705 = vunpack.c.l.b16 %v1599
  %v1706 = vunpack.c.h.b16 %v1599
  %v1707 = vunpack.c.l.b16 %v1600
  %v1708 = vunpack.c.h.b16 %v1600
  %v1709 = vpack.c.b16 %v1647, %v1645
  %v1710 = vpack.c.b16 %v1648, %v1646
  %v1711 = vpack.c.b16 %v1651, %v1649
  %v1712 = vpack.c.b16 %v1652, %v1650
  %v1713 = vpack.c.b16 %v1655, %v1653
  %v1714 = vpack.c.b16 %v1656, %v1654
  %v1715 = vpack.c.b16 %v1659, %v1657
  %v1716 = vpack.c.b16 %v1660, %v1658
  %v1717 = vpack.c.b16 %v1663, %v1661
  %v1718 = vpack.c.b16 %v1664, %v1662
  %v1719 = vpack.c.b16 %v1667, %v1665
  %v1720 = vpack.c.b16 %v1668, %v1666
  %v1721 = vpack.c.b16 %v1671, %v1669
  %v1722 = vpack.c.b16 %v1672, %v1670
  %v1723 = vpack.c.b16 %v1675, %v1673
  %v1724 = vpack.c.b16 %v1676, %v1674
  %v1725 = vpack.c.b16 %v1679, %v1677
  %v1726 = vpack.c.b16 %v1680, %v1678
  %v1727 = vpack.c.b16 %v1683, %v1681
  %v1728 = vpack.c.b16 %v1684, %v1682
  %v1729 = vpack.c.b16 %v1687, %v1685
  %v1730 = vpack.c.b16 %v1688, %v1686
  %v1731 = vpack.c.b16 %v1691, %v1689
  %v1732 = vpack.c.b16 %v1692, %v1690
  %v1733 = vpack.c.b16 %v1695, %v1693
  %v1734 = vpack.c.b16 %v1696, %v1694
  %v1735 = vpack.c.b16 %v1699, %v1697
  %v1736 = vpack.c.b16 %v1700, %v1698
  %v1737 = vpack.c.b16 %v1703, %v1701
  %v1738 = vpack.c.b16 %v1704, %v1702
  %v1739 = vpack.c.b16 %v1707, %v1705
  %v1740 = vpack.c.b16 %v1708, %v1706
  %1773 = vmatprep.subr.bf16.mxu0 %v1710
  %1774 = vmatpush1.bf16.msra.mxu0 %v1709
  %1775 = vmatprep.subr.bf16.mxu0 %v1712
  %1776 = vmatpush1.bf16.msra.mxu0 %v1711
  %1777 = vmatprep.subr.bf16.mxu0 %v1714
  %1778 = vmatpush1.bf16.msra.mxu0 %v1713
  %1779 = vmatprep.subr.bf16.mxu0 %v1716
  %1780 = vmatpush1.bf16.msra.mxu0 %v1715
  %1781 = vmatprep.subr.bf16.mxu0 %v1718
  %1782 = vmatpush1.bf16.msra.mxu0 %v1717
  %1783 = vmatprep.subr.bf16.mxu0 %v1720
  %1784 = vmatpush1.bf16.msra.mxu0 %v1719
  %1785 = vmatprep.subr.bf16.mxu0 %v1722
  %1786 = vmatpush1.bf16.msra.mxu0 %v1721
  %1787 = vmatprep.subr.bf16.mxu0 %v1724
  %1788 = vmatpush1.bf16.msra.mxu0 %v1723
  %1789 = vmatprep.subr.bf16.mxu0 %v1726
  %1790 = vmatpush1.bf16.msra.mxu0 %v1725
  %1791 = vmatprep.subr.bf16.mxu0 %v1728
  %1792 = vmatpush1.bf16.msra.mxu0 %v1727
  %1793 = vmatprep.subr.bf16.mxu0 %v1730
  %1794 = vmatpush1.bf16.msra.mxu0 %v1729
  %1795 = vmatprep.subr.bf16.mxu0 %v1732
  %1796 = vmatpush1.bf16.msra.mxu0 %v1731
  %1797 = vmatprep.subr.bf16.mxu0 %v1734
  %1798 = vmatpush1.bf16.msra.mxu0 %v1733
  %1799 = vmatprep.subr.bf16.mxu0 %v1736
  %1800 = vmatpush1.bf16.msra.mxu0 %v1735
  %1801 = vmatprep.subr.bf16.mxu0 %v1738
  %1802 = vmatpush1.bf16.msra.mxu0 %v1737
  %1803 = vmatprep.subr.bf16.mxu0 %v1740
  %1804 = vmatpush1.bf16.msra.mxu0 %v1739
  %1805 = vmatprep.mubr.bf16.mxu0 %v1568
  %1806 = vmatmul.mubr.bf16.gmra.mrb[0].mxu0 %v1567
  %v1807 = vpop.f32.mrb[0].mxu0
  %v1808 = vadd.f32 %v1606, %v1807
  %v1809 = vpop.f32.mrb[0].mxu0
  %v1810 = vadd.f32 %v1610, %v1809
  %v1811 = vpop.f32.mrb[0].mxu0
  %v1812 = vpop.f32.mrb[0].mxu0
  %1813 = vdwg.mxu0
  %v1814 = vmax.f32 %v1808, 0.0
  %v1815 = vmax.f32 %v1810, 0.0
  %v1816 = vpack.c.bf16 %v1814, %v1814
  %v1817 = vpack.c.bf16 %v1815, %v1815
  %v1818 = vld [vmem:[%s1 + $0x6b0] sm:$0xff]
  %v1819 = vld [vmem:[%s1 + $0x6b8] sm:$0xff]
  %v1820 = vld [vmem:[%s1 + $0x6c0] sm:$0xff]
  %v1821 = vld [vmem:[%s1 + $0x6c8] sm:$0xff]
  %v1822 = vld [vmem:[%s1 + $0x6d0] sm:$0xff]
  %v1823 = vld [vmem:[%s1 + $0x6d8] sm:$0xff]
  %v1824 = vld [vmem:[%s1 + $0x6e0] sm:$0xff]
  %v1825 = vld [vmem:[%s1 + $0x6e8] sm:$0xff]
  %v1826 = vld [vmem:[%s1 + $0x6f0] sm:$0xff]
  %v1827 = vld [vmem:[%s1 + $0x6f8] sm:$0xff]
  %v1828 = vld [vmem:[%s1 + $0x700] sm:$0xff]
  %v1829 = vld [vmem:[%s1 + $0x708] sm:$0xff]
  %v1830 = vld [vmem:[%s1 + $0x710] sm:$0xff]
  %v1831 = vld [vmem:[%s1 + $0x718] sm:$0xff]
  %v1832 = vld [vmem:[%s1 + $0x720] sm:$0xff]
  %v1833 = vld [vmem:[%s1 + $0x728] sm:$0xff]
  %v1834 = vld [vmem:[%s1 + $0x730] sm:$0xff]
  %v1835 = vld [vmem:[%s1 + $0x738] sm:$0xff]
  %v1836 = vld [vmem:[%s1 + $0x740] sm:$0xff]
  %v1837 = vld [vmem:[%s1 + $0x748] sm:$0xff]
  %v1838 = vld [vmem:[%s1 + $0x750] sm:$0xff]
  %v1839 = vld [vmem:[%s1 + $0x758] sm:$0xff]
  %v1840 = vld [vmem:[%s1 + $0x760] sm:$0xff]
  %v1841 = vld [vmem:[%s1 + $0x768] sm:$0xff]
  %v1842 = vld [vmem:[%s1 + $0x770] sm:$0xff]
  %v1843 = vld [vmem:[%s1 + $0x778] sm:$0xff]
  %v1844 = vld [vmem:[%s1 + $0x780] sm:$0xff]
  %v1845 = vld [vmem:[%s1 + $0x788] sm:$0xff]
  %v1846 = vld [vmem:[%s1 + $0x790] sm:$0xff]
  %v1847 = vld [vmem:[%s1 + $0x798] sm:$0xff]
  %v1848 = vld [vmem:[%s1 + $0x7a0] sm:$0xff]
  %v1849 = vld [vmem:[%s1 + $0x7a8] sm:$0xff]
  %v1850 = vld [vmem:[%s2 + $0x8] sm:$0x3]
  %v1852 = vlaneseq
  %v1853 = vshrl.u32 %v1852, 7
  %v1854 = vsub.s32 0, %v1853
  %v1855 = vrot.slane %v1850, %v1854
  %v1856 = vlaneseq
  %v1857 = vshrl.u32 %v1856, 7
  %v1858 = vsub.s32 1, %v1857
  %v1859 = vrot.slane %v1850, %v1858
  %v1894 = vunpack.c.l.b16 %v1818
  %v1895 = vunpack.c.h.b16 %v1818
  %v1896 = vunpack.c.l.b16 %v1819
  %v1897 = vunpack.c.h.b16 %v1819
  %v1898 = vunpack.c.l.b16 %v1820
  %v1899 = vunpack.c.h.b16 %v1820
  %v1900 = vunpack.c.l.b16 %v1821
  %v1901 = vunpack.c.h.b16 %v1821
  %v1902 = vunpack.c.l.b16 %v1822
  %v1903 = vunpack.c.h.b16 %v1822
  %v1904 = vunpack.c.l.b16 %v1823
  %v1905 = vunpack.c.h.b16 %v1823
  %v1906 = vunpack.c.l.b16 %v1824
  %v1907 = vunpack.c.h.b16 %v1824
  %v1908 = vunpack.c.l.b16 %v1825
  %v1909 = vunpack.c.h.b16 %v1825
  %v1910 = vunpack.c.l.b16 %v1826
  %v1911 = vunpack.c.h.b16 %v1826
  %v1912 = vunpack.c.l.b16 %v1827
  %v1913 = vunpack.c.h.b16 %v1827
  %v1914 = vunpack.c.l.b16 %v1828
  %v1915 = vunpack.c.h.b16 %v1828
  %v1916 = vunpack.c.l.b16 %v1829
  %v1917 = vunpack.c.h.b16 %v1829
  %v1918 = vunpack.c.l.b16 %v1830
  %v1919 = vunpack.c.h.b16 %v1830
  %v1920 = vunpack.c.l.b16 %v1831
  %v1921 = vunpack.c.h.b16 %v1831
  %v1922 = vunpack.c.l.b16 %v1832
  %v1923 = vunpack.c.h.b16 %v1832
  %v1924 = vunpack.c.l.b16 %v1833
  %v1925 = vunpack.c.h.b16 %v1833
  %v1926 = vunpack.c.l.b16 %v1834
  %v1927 = vunpack.c.h.b16 %v1834
  %v1928 = vunpack.c.l.b16 %v1835
  %v1929 = vunpack.c.h.b16 %v1835
  %v1930 = vunpack.c.l.b16 %v1836
  %v1931 = vunpack.c.h.b16 %v1836
  %v1932 = vunpack.c.l.b16 %v1837
  %v1933 = vunpack.c.h.b16 %v1837
  %v1934 = vunpack.c.l.b16 %v1838
  %v1935 = vunpack.c.h.b16 %v1838
  %v1936 = vunpack.c.l.b16 %v1839
  %v1937 = vunpack.c.h.b16 %v1839
  %v1938 = vunpack.c.l.b16 %v1840
  %v1939 = vunpack.c.h.b16 %v1840
  %v1940 = vunpack.c.l.b16 %v1841
  %v1941 = vunpack.c.h.b16 %v1841
  %v1942 = vunpack.c.l.b16 %v1842
  %v1943 = vunpack.c.h.b16 %v1842
  %v1944 = vunpack.c.l.b16 %v1843
  %v1945 = vunpack.c.h.b16 %v1843
  %v1946 = vunpack.c.l.b16 %v1844
  %v1947 = vunpack.c.h.b16 %v1844
  %v1948 = vunpack.c.l.b16 %v1845
  %v1949 = vunpack.c.h.b16 %v1845
  %v1950 = vunpack.c.l.b16 %v1846
  %v1951 = vunpack.c.h.b16 %v1846
  %v1952 = vunpack.c.l.b16 %v1847
  %v1953 = vunpack.c.h.b16 %v1847
  %v1954 = vunpack.c.l.b16 %v1848
  %v1955 = vunpack.c.h.b16 %v1848
  %v1956 = vunpack.c.l.b16 %v1849
  %v1957 = vunpack.c.h.b16 %v1849
  %v1958 = vpack.c.b16 %v1896, %v1894
  %v1959 = vpack.c.b16 %v1897, %v1895
  %v1960 = vpack.c.b16 %v1900, %v1898
  %v1961 = vpack.c.b16 %v1901, %v1899
  %v1962 = vpack.c.b16 %v1904, %v1902
  %v1963 = vpack.c.b16 %v1905, %v1903
  %v1964 = vpack.c.b16 %v1908, %v1906
  %v1965 = vpack.c.b16 %v1909, %v1907
  %v1966 = vpack.c.b16 %v1912, %v1910
  %v1967 = vpack.c.b16 %v1913, %v1911
  %v1968 = vpack.c.b16 %v1916, %v1914
  %v1969 = vpack.c.b16 %v1917, %v1915
  %v1970 = vpack.c.b16 %v1920, %v1918
  %v1971 = vpack.c.b16 %v1921, %v1919
  %v1972 = vpack.c.b16 %v1924, %v1922
  %v1973 = vpack.c.b16 %v1925, %v1923
  %v1974 = vpack.c.b16 %v1928, %v1926
  %v1975 = vpack.c.b16 %v1929, %v1927
  %v1976 = vpack.c.b16 %v1932, %v1930
  %v1977 = vpack.c.b16 %v1933, %v1931
  %v1978 = vpack.c.b16 %v1936, %v1934
  %v1979 = vpack.c.b16 %v1937, %v1935
  %v1980 = vpack.c.b16 %v1940, %v1938
  %v1981 = vpack.c.b16 %v1941, %v1939
  %v1982 = vpack.c.b16 %v1944, %v1942
  %v1983 = vpack.c.b16 %v1945, %v1943
  %v1984 = vpack.c.b16 %v1948, %v1946
  %v1985 = vpack.c.b16 %v1949, %v1947
  %v1986 = vpack.c.b16 %v1952, %v1950
  %v1987 = vpack.c.b16 %v1953, %v1951
  %v1988 = vpack.c.b16 %v1956, %v1954
  %v1989 = vpack.c.b16 %v1957, %v1955
  %2022 = vmatprep.subr.bf16.mxu0 %v1959
  %2023 = vmatpush1.bf16.msra.mxu0 %v1958
  %2024 = vmatprep.subr.bf16.mxu0 %v1961
  %2025 = vmatpush1.bf16.msra.mxu0 %v1960
  %2026 = vmatprep.subr.bf16.mxu0 %v1963
  %2027 = vmatpush1.bf16.msra.mxu0 %v1962
  %2028 = vmatprep.subr.bf16.mxu0 %v1965
  %2029 = vmatpush1.bf16.msra.mxu0 %v1964
  %2030 = vmatprep.subr.bf16.mxu0 %v1967
  %2031 = vmatpush1.bf16.msra.mxu0 %v1966
  %2032 = vmatprep.subr.bf16.mxu0 %v1969
  %2033 = vmatpush1.bf16.msra.mxu0 %v1968
  %2034 = vmatprep.subr.bf16.mxu0 %v1971
  %2035 = vmatpush1.bf16.msra.mxu0 %v1970
  %2036 = vmatprep.subr.bf16.mxu0 %v1973
  %2037 = vmatpush1.bf16.msra.mxu0 %v1972
  %2038 = vmatprep.subr.bf16.mxu0 %v1975
  %2039 = vmatpush1.bf16.msra.mxu0 %v1974
  %2040 = vmatprep.subr.bf16.mxu0 %v1977
  %2041 = vmatpush1.bf16.msra.mxu0 %v1976
  %2042 = vmatprep.subr.bf16.mxu0 %v1979
  %2043 = vmatpush1.bf16.msra.mxu0 %v1978
  %2044 = vmatprep.subr.bf16.mxu0 %v1981
  %2045 = vmatpush1.bf16.msra.mxu0 %v1980
  %2046 = vmatprep.subr.bf16.mxu0 %v1983
  %2047 = vmatpush1.bf16.msra.mxu0 %v1982
  %2048 = vmatprep.subr.bf16.mxu0 %v1985
  %2049 = vmatpush1.bf16.msra.mxu0 %v1984
  %2050 = vmatprep.subr.bf16.mxu0 %v1987
  %2051 = vmatpush1.bf16.msra.mxu0 %v1986
  %2052 = vmatprep.subr.bf16.mxu0 %v1989
  %2053 = vmatpush1.bf16.msra.mxu0 %v1988
  %2054 = vmatprep.mubr.bf16.mxu0 %v1817
  %2055 = vmatmul.mubr.bf16.gmra.mrb[0].mxu0 %v1816
  %v2056 = vpop.f32.mrb[0].mxu0
  %v2057 = vadd.f32 %v1855, %v2056
  %v2058 = vpop.f32.mrb[0].mxu0
  %v2059 = vadd.f32 %v1859, %v2058
  %v2060 = vpop.f32.mrb[0].mxu0
  %v2061 = vpop.f32.mrb[0].mxu0
  %2062 = vdwg.mxu0
  %v2065 = vcombine.low %v2057, %v2059
  %v2067 = vunpack.c.l.s4 1983009808
  %v2068 = vunpack.c.0.s8 %v2067
  %v2069 = vlaneseq
  %v2070 = vshrl.u32 %v2069, 7
  %v2071 = vsub.s32 %v2068, %v2070
  %v2072 = vrot.slane %v2065, %v2071
  %2074 = vst [vmem:[%s3] sm:$0xf] %v2072
  // Predicated region
  $region14: #{critic_forward.1} parent=0 // pred_check
    _
  $region15: #{critic_forward.1} parent=0 // pred_check_branch
    %2076 = sbr.rel (0) target = $region17
  $region16: #{critic_forward.1} parent=0 // pred_region
    _
  $region17: #{critic_forward.1} parent=0 // pred_fallthru
    _
  // Predicated region
  $region18: #{critic_forward.1} parent=0 // pred_check
    _
  $region19: #{critic_forward.1} parent=0 // pred_check_branch
    %2078 = sbr.rel (0) target = $region21
  $region20: #{critic_forward.1} parent=0 // pred_region
    _
  $region21: #{critic_forward.1} parent=0 // pred_fallthru
    _

</llo_original>
